<compile_context>
chip_gen: v5e
topology: v5e:2x2
jax: 0.10.0
libtpu: 0.0.40
codegen_flags: <defaults>
</compile_context>

<pallas_src>
import math

import jax
import jax.numpy as jnp
from jax.experimental import pallas as pl
from jax.experimental.pallas import tpu as pltpu


# ----------------------------------------------------------------------------
# Fused encoder kernel
# ----------------------------------------------------------------------------
def _make_encoder_kernel(T, B, H, L):
    """Builds the fused kernel for static (T, B, H, L)."""

    def kernel(*refs):
        it = iter(refs)
        x_ref = next(it)                        # (T*B, Din0) time-major, flattened
        w_ih = [next(it) for _ in range(L)]     # (Din_l, 4H)
        w_hh = [next(it) for _ in range(L)]     # (H, 4H)
        bias = [next(it) for _ in range(L)]     # (1, 4H)  == b_ih + b_hh
        w_proj_ref = next(it)                   # (H*L, 2H) == [w_mu | w_lv]
        b_proj_ref = next(it)                   # (1, 2H)
        eps_ref = next(it)                      # (L, B, H)
        mu_ref = next(it)                       # (B, H)
        lv_ref = next(it)                       # (B, H)
        z_ref = next(it)                        # (L, B, H)
        cell_ref = next(it)                     # (L, B, H)

        # Lane mask selecting the "g" gate (PyTorch order i, f, g, o) so all four
        # gate activations run on the full 4H-lane vreg with one tanh + one sigmoid.
        lane = jax.lax.broadcasted_iota(jnp.int32, (B, 4 * H), 1)
        g_mask = (lane >= 2 * H) & (lane < 3 * H)

        inp = x_ref[...]                        # (T*B, Din_l) for the current layer
        h_finals = []
        for l in range(L):
            # Hoisted input projection: one batched MXU matmul for the whole sequence.
            x_proj = jnp.dot(inp, w_ih[l][...],
                             preferred_element_type=jnp.float32) + bias[l][...]
            w_hh_l = w_hh[l][...]
            h = jnp.zeros((B, H), jnp.float32)
            c = jnp.zeros((B, H), jnp.float32)
            ys = []
            for t in range(T):                  # fully unrolled (T small, static)
                gates = x_proj[t * B:(t + 1) * B, :] + jnp.dot(
                    h, w_hh_l, preferred_element_type=jnp.float32)   # (B, 4H)
                act = jnp.where(g_mask, jnp.tanh(gates), jax.nn.sigmoid(gates))
                i_g = act[:, 0 * H:1 * H]
                f_g = act[:, 1 * H:2 * H]
                g_g = act[:, 2 * H:3 * H]
                o_g = act[:, 3 * H:4 * H]
                c = f_g * c + i_g * g_g
                h = o_g * jnp.tanh(c)
                if l < L - 1:
                    ys.append(h)                # per-step output only feeds next layer
            h_finals.append(h)
            cell_ref[l] = c                     # final cell state of this layer
            if l < L - 1:
                inp = jnp.concatenate(ys, axis=0)   # (T*B, H) next-layer input

        # Reproduce torch's raw `hidden.view(B, H*L)` on the contiguous (L, B, H)
        # stack: output row b covers flat elements [b*H*L, (b+1)*H*L).  Built with
        # static slices + concat (no in-kernel 3D->2D reshape).
        if L > 1:
            rows = []
            for b in range(B):
                segs = []
                for j in range(L):
                    flat_row = b * L + j        # row index into the (L*B, H) flattening
                    lyr, bb = flat_row // B, flat_row % B
                    segs.append(h_finals[lyr][bb:bb + 1, :])          # (1, H)
                rows.append(jnp.concatenate(segs, axis=1))            # (1, H*L)
            hidden_flat = jnp.concatenate(rows, axis=0)               # (B, H*L)
        else:
            # TODO(synk): torch's .squeeze() collapses B==1 to a 1-D tensor; we keep (B, H).
            hidden_flat = h_finals[0]

        # Fused mu / logvar projection (single MXU matmul), then reparametrize.
        proj = jnp.dot(hidden_flat, w_proj_ref[...],
                       preferred_element_type=jnp.float32) + b_proj_ref[...]  # (B, 2H)
        mu = proj[:, 0:H]
        lv = proj[:, H:2 * H]
        mu_ref[...] = mu
        lv_ref[...] = lv
        std = jnp.exp(0.5 * lv)
        for l in range(L):
            z_ref[l] = eps_ref[l] * std + mu

    return kernel


def encoder_forward(x_tm, w_ih_list, w_hh_list, b_list, w_proj, b_proj, eps,
                    *, T, B, H, L):
    """x_tm: (T*B, Din) f32, time-major.  Returns (mu, logvar, z, cell)."""
    kernel = _make_encoder_kernel(T, B, H, L)
    vmem = pl.BlockSpec(memory_space=pltpu.MemorySpace.VMEM)
    n_in = 1 + 3 * L + 3
    return pl.pallas_call(
        kernel,
        out_shape=(jax.ShapeDtypeStruct((B, H), jnp.float32),
                   jax.ShapeDtypeStruct((B, H), jnp.float32),
                   jax.ShapeDtypeStruct((L, B, H), jnp.float32),
                   jax.ShapeDtypeStruct((L, B, H), jnp.float32)),
        in_specs=[vmem] * n_in,
        out_specs=(vmem, vmem, vmem, vmem),
    )(x_tm, *w_ih_list, *w_hh_list, *b_list, w_proj, b_proj, eps)


# ----------------------------------------------------------------------------
# Encoder module (parameter init + glue)
# ----------------------------------------------------------------------------
class EncoderPallas:
    def __init__(self, input_size, hidden_size, num_layers, key):
        self.input_size = input_size
        self.hidden_size = hidden_size
        self.num_layers = num_layers
        H = hidden_size
        stdv = 1.0 / math.sqrt(H)

        keys = jax.random.split(key, num_layers * 4 + 4)
        ki = iter(range(len(keys)))

        def unif(k, shape, bound):
            return jax.random.uniform(keys[k], shape, jnp.float32, -bound, bound)

        self.w_ih, self.w_hh, self.b = [], [], []
        for layer in range(num_layers):
            din = input_size if layer == 0 else H
            w_ih = unif(next(ki), (4 * H, din), stdv).T           # -> (din, 4H)
            w_hh = unif(next(ki), (4 * H, H), stdv).T             # -> (H, 4H)
            b_ih = unif(next(ki), (4 * H,), stdv)
            b_hh = unif(next(ki), (4 * H,), stdv)
            self.w_ih.append(jnp.asarray(w_ih, jnp.float32))
            self.w_hh.append(jnp.asarray(w_hh, jnp.float32))
            self.b.append((b_ih + b_hh).reshape(1, 4 * H))

        lin_in = H * num_layers
        lin_bound = 1.0 / math.sqrt(lin_in)
        w_mu = unif(next(ki), (H, lin_in), lin_bound).T           # (H*L, H)
        b_mu = unif(next(ki), (H,), lin_bound)
        w_lv = unif(next(ki), (H, lin_in), lin_bound).T           # (H*L, H)
        b_lv = unif(next(ki), (H,), lin_bound)
        self.w_proj = jnp.concatenate([w_mu, w_lv], axis=1)       # (H*L, 2H)
        self.b_proj = jnp.concatenate([b_mu, b_lv]).reshape(1, 2 * H)

    def __call__(self, x, noise_key):
        # x: (B, T, input_size), batch_first like the PyTorch module.
        B, T, _ = x.shape
        x_tm = jnp.transpose(x.astype(jnp.float32), (1, 0, 2)).reshape(T * B, -1)

        # torch.randn([L, B, H]) equivalent (deterministic via JAX host PRNG).
        eps = jax.random.normal(noise_key,
                                (self.num_layers, B, self.hidden_size),
                                jnp.float32)

        mu, logvar, z, cell = encoder_forward(
            x_tm, self.w_ih, self.w_hh, self.b, self.w_proj, self.b_proj, eps,
            T=T, B=B, H=self.hidden_size, L=self.num_layers)
        return mu, logvar, (z, cell)


if __name__ == "__main__":
    # Small shapes: batch=2, seq=8, input_size=4, hidden=32, layers=2
    input_size, hidden_size, num_layers = 4, 32, 2
    B, T = 2, 8

    root = jax.random.PRNGKey(0)
    k_param, k_x, k_noise = jax.random.split(root, 3)

    enc = EncoderPallas(input_size, hidden_size, num_layers, k_param)
    x = jax.random.normal(k_x, (B, T, input_size), jnp.float32)

    mu, logvar, (z, cell) = enc(x, k_noise)
    jax.block_until_ready((mu, logvar, z, cell))

    assert mu.shape == (B, hidden_size)
    assert logvar.shape == (B, hidden_size)
    assert z.shape == (num_layers, B, hidden_size)
    assert cell.shape == (num_layers, B, hidden_size)
    assert bool(jnp.all(jnp.isfinite(mu))) and bool(jnp.all(jnp.isfinite(z)))
    assert bool(jnp.all(jnp.isfinite(logvar))) and bool(jnp.all(jnp.isfinite(cell)))

    print("KERNEL_OK")
</pallas_src>

<mosaic_0001>
module attributes {stable_mosaic.version = 11 : i64} {
  func.func @kernel(%arg0: memref<16x4xf32, #tpu.memory_space<vmem>>, %arg1: memref<4x128xf32, #tpu.memory_space<vmem>>, %arg2: memref<32x128xf32, #tpu.memory_space<vmem>>, %arg3: memref<32x128xf32, #tpu.memory_space<vmem>>, %arg4: memref<32x128xf32, #tpu.memory_space<vmem>>, %arg5: memref<1x128xf32, #tpu.memory_space<vmem>>, %arg6: memref<1x128xf32, #tpu.memory_space<vmem>>, %arg7: memref<64x64xf32, #tpu.memory_space<vmem>>, %arg8: memref<1x64xf32, #tpu.memory_space<vmem>>, %arg9: memref<2x2x32xf32, #tpu.memory_space<vmem>>, %arg10: memref<2x32xf32, #tpu.memory_space<vmem>>, %arg11: memref<2x32xf32, #tpu.memory_space<vmem>>, %arg12: memref<2x2x32xf32, #tpu.memory_space<vmem>>, %arg13: memref<2x2x32xf32, #tpu.memory_space<vmem>>) attributes {dimension_semantics = [], scalar_prefetch = 0 : i64, scratch_operands = 0 : i64, tpu.core_type = #tpu.core_type<tc>} {
    %0 = tpu.iota {dimensions = array<i32: 1>} : vector<2x128xi32>
    %c64_i32 = arith.constant 64 : i32
    %1 = vector.broadcast %c64_i32 : i32 to vector<2x128xi32>
    %2 = arith.cmpi sge, %0, %1 : vector<2x128xi32>
    %c96_i32 = arith.constant 96 : i32
    %3 = vector.broadcast %c96_i32 : i32 to vector<2x128xi32>
    %4 = arith.cmpi slt, %0, %3 : vector<2x128xi32>
    %5 = arith.andi %2, %4 : vector<2x128xi1>
    %c0 = arith.constant 0 : index
    %c0_0 = arith.constant 0 : index
    %6 = vector.load %arg0[%c0, %c0_0] : memref<16x4xf32, #tpu.memory_space<vmem>>, vector<16x4xf32>
    %c0_1 = arith.constant 0 : index
    %c0_2 = arith.constant 0 : index
    %7 = vector.load %arg1[%c0_1, %c0_2] : memref<4x128xf32, #tpu.memory_space<vmem>>, vector<4x128xf32>
    %cst = arith.constant dense<0.000000e+00> : vector<16x128xf32>
    %8 = tpu.matmul %6, %7, %cst {dimension_numbers = #tpu.dot_dimension_numbers<[1], [0], [0], [1], [0, 0, 1, 1], [], []>} : vector<16x4xf32>, vector<4x128xf32>, vector<16x128xf32> -> vector<16x128xf32>
    %c0_3 = arith.constant 0 : index
    %c0_4 = arith.constant 0 : index
    %9 = vector.load %arg5[%c0_3, %c0_4] : memref<1x128xf32, #tpu.memory_space<vmem>>, vector<1x128xf32>
    %10 = vector.broadcast %9 : vector<1x128xf32> to vector<16x128xf32>
    %11 = arith.addf %8, %10 : vector<16x128xf32>
    %c0_5 = arith.constant 0 : index
    %c0_6 = arith.constant 0 : index
    %12 = vector.load %arg3[%c0_5, %c0_6] : memref<32x128xf32, #tpu.memory_space<vmem>>, vector<32x128xf32>
    %cst_7 = arith.constant 0.000000e+00 : f32
    %13 = vector.broadcast %cst_7 : f32 to vector<2x32xf32>
    %cst_8 = arith.constant 0.000000e+00 : f32
    %14 = vector.broadcast %cst_8 : f32 to vector<2x32xf32>
    %15 = vector.extract_strided_slice %11 {offsets = [0, 0], sizes = [2, 128], strides = [1, 1]} : vector<16x128xf32> to vector<2x128xf32>
    %cst_9 = arith.constant dense<0.000000e+00> : vector<2x128xf32>
    %16 = tpu.matmul %13, %12, %cst_9 {dimension_numbers = #tpu.dot_dimension_numbers<[1], [0], [0], [1], [0, 0, 1, 1], [], []>} : vector<2x32xf32>, vector<32x128xf32>, vector<2x128xf32> -> vector<2x128xf32>
    %17 = arith.addf %15, %16 : vector<2x128xf32>
    %18 = math.tanh %17 : vector<2x128xf32>
    %19 = arith.negf %17 : vector<2x128xf32>
    %20 = math.exp %19 : vector<2x128xf32>
    %cst_10 = arith.constant 1.000000e+00 : f32
    %21 = vector.broadcast %cst_10 : f32 to vector<2x128xf32>
    %22 = arith.addf %21, %20 : vector<2x128xf32>
    %23 = arith.divf %21, %22 : vector<2x128xf32>
    %24 = arith.select %5, %18, %23 : vector<2x128xi1>, vector<2x128xf32>
    %25 = vector.extract_strided_slice %24 {offsets = [0, 0], sizes = [2, 32], strides = [1, 1]} : vector<2x128xf32> to vector<2x32xf32>
    %26 = vector.extract_strided_slice %24 {offsets = [0, 32], sizes = [2, 32], strides = [1, 1]} : vector<2x128xf32> to vector<2x32xf32>
    %27 = vector.extract_strided_slice %24 {offsets = [0, 64], sizes = [2, 32], strides = [1, 1]} : vector<2x128xf32> to vector<2x32xf32>
    %28 = vector.extract_strided_slice %24 {offsets = [0, 96], sizes = [2, 32], strides = [1, 1]} : vector<2x128xf32> to vector<2x32xf32>
    %29 = arith.mulf %26, %14 : vector<2x32xf32>
    %30 = arith.mulf %25, %27 : vector<2x32xf32>
    %31 = arith.addf %29, %30 : vector<2x32xf32>
    %32 = math.tanh %31 : vector<2x32xf32>
    %33 = arith.mulf %28, %32 : vector<2x32xf32>
    %34 = vector.extract_strided_slice %11 {offsets = [2, 0], sizes = [2, 128], strides = [1, 1]} : vector<16x128xf32> to vector<2x128xf32>
    %cst_11 = arith.constant dense<0.000000e+00> : vector<2x128xf32>
    %35 = tpu.matmul %33, %12, %cst_11 {dimension_numbers = #tpu.dot_dimension_numbers<[1], [0], [0], [1], [0, 0, 1, 1], [], []>} : vector<2x32xf32>, vector<32x128xf32>, vector<2x128xf32> -> vector<2x128xf32>
    %36 = arith.addf %34, %35 : vector<2x128xf32>
    %37 = math.tanh %36 : vector<2x128xf32>
    %38 = arith.negf %36 : vector<2x128xf32>
    %39 = math.exp %38 : vector<2x128xf32>
    %cst_12 = arith.constant 1.000000e+00 : f32
    %40 = vector.broadcast %cst_12 : f32 to vector<2x128xf32>
    %41 = arith.addf %40, %39 : vector<2x128xf32>
    %42 = arith.divf %40, %41 : vector<2x128xf32>
    %43 = arith.select %5, %37, %42 : vector<2x128xi1>, vector<2x128xf32>
    %44 = vector.extract_strided_slice %43 {offsets = [0, 0], sizes = [2, 32], strides = [1, 1]} : vector<2x128xf32> to vector<2x32xf32>
    %45 = vector.extract_strided_slice %43 {offsets = [0, 32], sizes = [2, 32], strides = [1, 1]} : vector<2x128xf32> to vector<2x32xf32>
    %46 = vector.extract_strided_slice %43 {offsets = [0, 64], sizes = [2, 32], strides = [1, 1]} : vector<2x128xf32> to vector<2x32xf32>
    %47 = vector.extract_strided_slice %43 {offsets = [0, 96], sizes = [2, 32], strides = [1, 1]} : vector<2x128xf32> to vector<2x32xf32>
    %48 = arith.mulf %45, %31 : vector<2x32xf32>
    %49 = arith.mulf %44, %46 : vector<2x32xf32>
    %50 = arith.addf %48, %49 : vector<2x32xf32>
    %51 = math.tanh %50 : vector<2x32xf32>
    %52 = arith.mulf %47, %51 : vector<2x32xf32>
    %53 = vector.extract_strided_slice %11 {offsets = [4, 0], sizes = [2, 128], strides = [1, 1]} : vector<16x128xf32> to vector<2x128xf32>
    %cst_13 = arith.constant dense<0.000000e+00> : vector<2x128xf32>
    %54 = tpu.matmul %52, %12, %cst_13 {dimension_numbers = #tpu.dot_dimension_numbers<[1], [0], [0], [1], [0, 0, 1, 1], [], []>} : vector<2x32xf32>, vector<32x128xf32>, vector<2x128xf32> -> vector<2x128xf32>
    %55 = arith.addf %53, %54 : vector<2x128xf32>
    %56 = math.tanh %55 : vector<2x128xf32>
    %57 = arith.negf %55 : vector<2x128xf32>
    %58 = math.exp %57 : vector<2x128xf32>
    %cst_14 = arith.constant 1.000000e+00 : f32
    %59 = vector.broadcast %cst_14 : f32 to vector<2x128xf32>
    %60 = arith.addf %59, %58 : vector<2x128xf32>
    %61 = arith.divf %59, %60 : vector<2x128xf32>
    %62 = arith.select %5, %56, %61 : vector<2x128xi1>, vector<2x128xf32>
    %63 = vector.extract_strided_slice %62 {offsets = [0, 0], sizes = [2, 32], strides = [1, 1]} : vector<2x128xf32> to vector<2x32xf32>
    %64 = vector.extract_strided_slice %62 {offsets = [0, 32], sizes = [2, 32], strides = [1, 1]} : vector<2x128xf32> to vector<2x32xf32>
    %65 = vector.extract_strided_slice %62 {offsets = [0, 64], sizes = [2, 32], strides = [1, 1]} : vector<2x128xf32> to vector<2x32xf32>
    %66 = vector.extract_strided_slice %62 {offsets = [0, 96], sizes = [2, 32], strides = [1, 1]} : vector<2x128xf32> to vector<2x32xf32>
    %67 = arith.mulf %64, %50 : vector<2x32xf32>
    %68 = arith.mulf %63, %65 : vector<2x32xf32>
    %69 = arith.addf %67, %68 : vector<2x32xf32>
    %70 = math.tanh %69 : vector<2x32xf32>
    %71 = arith.mulf %66, %70 : vector<2x32xf32>
    %72 = vector.extract_strided_slice %11 {offsets = [6, 0], sizes = [2, 128], strides = [1, 1]} : vector<16x128xf32> to vector<2x128xf32>
    %cst_15 = arith.constant dense<0.000000e+00> : vector<2x128xf32>
    %73 = tpu.matmul %71, %12, %cst_15 {dimension_numbers = #tpu.dot_dimension_numbers<[1], [0], [0], [1], [0, 0, 1, 1], [], []>} : vector<2x32xf32>, vector<32x128xf32>, vector<2x128xf32> -> vector<2x128xf32>
    %74 = arith.addf %72, %73 : vector<2x128xf32>
    %75 = math.tanh %74 : vector<2x128xf32>
    %76 = arith.negf %74 : vector<2x128xf32>
    %77 = math.exp %76 : vector<2x128xf32>
    %cst_16 = arith.constant 1.000000e+00 : f32
    %78 = vector.broadcast %cst_16 : f32 to vector<2x128xf32>
    %79 = arith.addf %78, %77 : vector<2x128xf32>
    %80 = arith.divf %78, %79 : vector<2x128xf32>
    %81 = arith.select %5, %75, %80 : vector<2x128xi1>, vector<2x128xf32>
    %82 = vector.extract_strided_slice %81 {offsets = [0, 0], sizes = [2, 32], strides = [1, 1]} : vector<2x128xf32> to vector<2x32xf32>
    %83 = vector.extract_strided_slice %81 {offsets = [0, 32], sizes = [2, 32], strides = [1, 1]} : vector<2x128xf32> to vector<2x32xf32>
    %84 = vector.extract_strided_slice %81 {offsets = [0, 64], sizes = [2, 32], strides = [1, 1]} : vector<2x128xf32> to vector<2x32xf32>
    %85 = vector.extract_strided_slice %81 {offsets = [0, 96], sizes = [2, 32], strides = [1, 1]} : vector<2x128xf32> to vector<2x32xf32>
    %86 = arith.mulf %83, %69 : vector<2x32xf32>
    %87 = arith.mulf %82, %84 : vector<2x32xf32>
    %88 = arith.addf %86, %87 : vector<2x32xf32>
    %89 = math.tanh %88 : vector<2x32xf32>
    %90 = arith.mulf %85, %89 : vector<2x32xf32>
    %91 = vector.extract_strided_slice %11 {offsets = [8, 0], sizes = [2, 128], strides = [1, 1]} : vector<16x128xf32> to vector<2x128xf32>
    %cst_17 = arith.constant dense<0.000000e+00> : vector<2x128xf32>
    %92 = tpu.matmul %90, %12, %cst_17 {dimension_numbers = #tpu.dot_dimension_numbers<[1], [0], [0], [1], [0, 0, 1, 1], [], []>} : vector<2x32xf32>, vector<32x128xf32>, vector<2x128xf32> -> vector<2x128xf32>
    %93 = arith.addf %91, %92 : vector<2x128xf32>
    %94 = math.tanh %93 : vector<2x128xf32>
    %95 = arith.negf %93 : vector<2x128xf32>
    %96 = math.exp %95 : vector<2x128xf32>
    %cst_18 = arith.constant 1.000000e+00 : f32
    %97 = vector.broadcast %cst_18 : f32 to vector<2x128xf32>
    %98 = arith.addf %97, %96 : vector<2x128xf32>
    %99 = arith.divf %97, %98 : vector<2x128xf32>
    %100 = arith.select %5, %94, %99 : vector<2x128xi1>, vector<2x128xf32>
    %101 = vector.extract_strided_slice %100 {offsets = [0, 0], sizes = [2, 32], strides = [1, 1]} : vector<2x128xf32> to vector<2x32xf32>
    %102 = vector.extract_strided_slice %100 {offsets = [0, 32], sizes = [2, 32], strides = [1, 1]} : vector<2x128xf32> to vector<2x32xf32>
    %103 = vector.extract_strided_slice %100 {offsets = [0, 64], sizes = [2, 32], strides = [1, 1]} : vector<2x128xf32> to vector<2x32xf32>
    %104 = vector.extract_strided_slice %100 {offsets = [0, 96], sizes = [2, 32], strides = [1, 1]} : vector<2x128xf32> to vector<2x32xf32>
    %105 = arith.mulf %102, %88 : vector<2x32xf32>
    %106 = arith.mulf %101, %103 : vector<2x32xf32>
    %107 = arith.addf %105, %106 : vector<2x32xf32>
    %108 = math.tanh %107 : vector<2x32xf32>
    %109 = arith.mulf %104, %108 : vector<2x32xf32>
    %110 = vector.extract_strided_slice %11 {offsets = [10, 0], sizes = [2, 128], strides = [1, 1]} : vector<16x128xf32> to vector<2x128xf32>
    %cst_19 = arith.constant dense<0.000000e+00> : vector<2x128xf32>
    %111 = tpu.matmul %109, %12, %cst_19 {dimension_numbers = #tpu.dot_dimension_numbers<[1], [0], [0], [1], [0, 0, 1, 1], [], []>} : vector<2x32xf32>, vector<32x128xf32>, vector<2x128xf32> -> vector<2x128xf32>
    %112 = arith.addf %110, %111 : vector<2x128xf32>
    %113 = math.tanh %112 : vector<2x128xf32>
    %114 = arith.negf %112 : vector<2x128xf32>
    %115 = math.exp %114 : vector<2x128xf32>
    %cst_20 = arith.constant 1.000000e+00 : f32
    %116 = vector.broadcast %cst_20 : f32 to vector<2x128xf32>
    %117 = arith.addf %116, %115 : vector<2x128xf32>
    %118 = arith.divf %116, %117 : vector<2x128xf32>
    %119 = arith.select %5, %113, %118 : vector<2x128xi1>, vector<2x128xf32>
    %120 = vector.extract_strided_slice %119 {offsets = [0, 0], sizes = [2, 32], strides = [1, 1]} : vector<2x128xf32> to vector<2x32xf32>
    %121 = vector.extract_strided_slice %119 {offsets = [0, 32], sizes = [2, 32], strides = [1, 1]} : vector<2x128xf32> to vector<2x32xf32>
    %122 = vector.extract_strided_slice %119 {offsets = [0, 64], sizes = [2, 32], strides = [1, 1]} : vector<2x128xf32> to vector<2x32xf32>
    %123 = vector.extract_strided_slice %119 {offsets = [0, 96], sizes = [2, 32], strides = [1, 1]} : vector<2x128xf32> to vector<2x32xf32>
    %124 = arith.mulf %121, %107 : vector<2x32xf32>
    %125 = arith.mulf %120, %122 : vector<2x32xf32>
    %126 = arith.addf %124, %125 : vector<2x32xf32>
    %127 = math.tanh %126 : vector<2x32xf32>
    %128 = arith.mulf %123, %127 : vector<2x32xf32>
    %129 = vector.extract_strided_slice %11 {offsets = [12, 0], sizes = [2, 128], strides = [1, 1]} : vector<16x128xf32> to vector<2x128xf32>
    %cst_21 = arith.constant dense<0.000000e+00> : vector<2x128xf32>
    %130 = tpu.matmul %128, %12, %cst_21 {dimension_numbers = #tpu.dot_dimension_numbers<[1], [0], [0], [1], [0, 0, 1, 1], [], []>} : vector<2x32xf32>, vector<32x128xf32>, vector<2x128xf32> -> vector<2x128xf32>
    %131 = arith.addf %129, %130 : vector<2x128xf32>
    %132 = math.tanh %131 : vector<2x128xf32>
    %133 = arith.negf %131 : vector<2x128xf32>
    %134 = math.exp %133 : vector<2x128xf32>
    %cst_22 = arith.constant 1.000000e+00 : f32
    %135 = vector.broadcast %cst_22 : f32 to vector<2x128xf32>
    %136 = arith.addf %135, %134 : vector<2x128xf32>
    %137 = arith.divf %135, %136 : vector<2x128xf32>
    %138 = arith.select %5, %132, %137 : vector<2x128xi1>, vector<2x128xf32>
    %139 = vector.extract_strided_slice %138 {offsets = [0, 0], sizes = [2, 32], strides = [1, 1]} : vector<2x128xf32> to vector<2x32xf32>
    %140 = vector.extract_strided_slice %138 {offsets = [0, 32], sizes = [2, 32], strides = [1, 1]} : vector<2x128xf32> to vector<2x32xf32>
    %141 = vector.extract_strided_slice %138 {offsets = [0, 64], sizes = [2, 32], strides = [1, 1]} : vector<2x128xf32> to vector<2x32xf32>
    %142 = vector.extract_strided_slice %138 {offsets = [0, 96], sizes = [2, 32], strides = [1, 1]} : vector<2x128xf32> to vector<2x32xf32>
    %143 = arith.mulf %140, %126 : vector<2x32xf32>
    %144 = arith.mulf %139, %141 : vector<2x32xf32>
    %145 = arith.addf %143, %144 : vector<2x32xf32>
    %146 = math.tanh %145 : vector<2x32xf32>
    %147 = arith.mulf %142, %146 : vector<2x32xf32>
    %148 = vector.extract_strided_slice %11 {offsets = [14, 0], sizes = [2, 128], strides = [1, 1]} : vector<16x128xf32> to vector<2x128xf32>
    %cst_23 = arith.constant dense<0.000000e+00> : vector<2x128xf32>
    %149 = tpu.matmul %147, %12, %cst_23 {dimension_numbers = #tpu.dot_dimension_numbers<[1], [0], [0], [1], [0, 0, 1, 1], [], []>} : vector<2x32xf32>, vector<32x128xf32>, vector<2x128xf32> -> vector<2x128xf32>
    %150 = arith.addf %148, %149 : vector<2x128xf32>
    %151 = math.tanh %150 : vector<2x128xf32>
    %152 = arith.negf %150 : vector<2x128xf32>
    %153 = math.exp %152 : vector<2x128xf32>
    %cst_24 = arith.constant 1.000000e+00 : f32
    %154 = vector.broadcast %cst_24 : f32 to vector<2x128xf32>
    %155 = arith.addf %154, %153 : vector<2x128xf32>
    %156 = arith.divf %154, %155 : vector<2x128xf32>
    %157 = arith.select %5, %151, %156 : vector<2x128xi1>, vector<2x128xf32>
    %158 = vector.extract_strided_slice %157 {offsets = [0, 0], sizes = [2, 32], strides = [1, 1]} : vector<2x128xf32> to vector<2x32xf32>
    %159 = vector.extract_strided_slice %157 {offsets = [0, 32], sizes = [2, 32], strides = [1, 1]} : vector<2x128xf32> to vector<2x32xf32>
    %160 = vector.extract_strided_slice %157 {offsets = [0, 64], sizes = [2, 32], strides = [1, 1]} : vector<2x128xf32> to vector<2x32xf32>
    %161 = vector.extract_strided_slice %157 {offsets = [0, 96], sizes = [2, 32], strides = [1, 1]} : vector<2x128xf32> to vector<2x32xf32>
    %162 = arith.mulf %159, %145 : vector<2x32xf32>
    %163 = arith.mulf %158, %160 : vector<2x32xf32>
    %164 = arith.addf %162, %163 : vector<2x32xf32>
    %165 = math.tanh %164 : vector<2x32xf32>
    %166 = arith.mulf %161, %165 : vector<2x32xf32>
    %c0_25 = arith.constant 0 : index
    %c0_26 = arith.constant 0 : index
    %c0_27 = arith.constant 0 : index
    %167 = vector.load %arg13[%c0_25, %c0_26, %c0_27] : memref<2x2x32xf32, #tpu.memory_space<vmem>>, vector<1x2x32xf32>
    %168 = vector.shape_cast %167 : vector<1x2x32xf32> to vector<2x32xf32>
    %169 = vector.shape_cast %164 : vector<2x32xf32> to vector<1x2x32xf32>
    tpu.vector_store %arg13[%c0_25, %c0_26, %c0_27], %169 {strides = array<i32>} : memref<2x2x32xf32, #tpu.memory_space<vmem>>, vector<1x2x32xf32>,
    %170 = tpu.concatenate %33, %52, %71, %90, %109, %128, %147, %166 in 0 : vector<2x32xf32>, vector<2x32xf32>, vector<2x32xf32>, vector<2x32xf32>, vector<2x32xf32>, vector<2x32xf32>, vector<2x32xf32>, vector<2x32xf32> -> vector<16x32xf32>
    %c0_28 = arith.constant 0 : index
    %c0_29 = arith.constant 0 : index
    %171 = vector.load %arg2[%c0_28, %c0_29] : memref<32x128xf32, #tpu.memory_space<vmem>>, vector<32x128xf32>
    %cst_30 = arith.constant dense<0.000000e+00> : vector<16x128xf32>
    %172 = tpu.matmul %170, %171, %cst_30 {dimension_numbers = #tpu.dot_dimension_numbers<[1], [0], [0], [1], [0, 0, 1, 1], [], []>} : vector<16x32xf32>, vector<32x128xf32>, vector<16x128xf32> -> vector<16x128xf32>
    %c0_31 = arith.constant 0 : index
    %c0_32 = arith.constant 0 : index
    %173 = vector.load %arg6[%c0_31, %c0_32] : memref<1x128xf32, #tpu.memory_space<vmem>>, vector<1x128xf32>
    %174 = vector.broadcast %173 : vector<1x128xf32> to vector<16x128xf32>
    %175 = arith.addf %172, %174 : vector<16x128xf32>
    %c0_33 = arith.constant 0 : index
    %c0_34 = arith.constant 0 : index
    %176 = vector.load %arg4[%c0_33, %c0_34] : memref<32x128xf32, #tpu.memory_space<vmem>>, vector<32x128xf32>
    %cst_35 = arith.constant 0.000000e+00 : f32
    %177 = vector.broadcast %cst_35 : f32 to vector<2x32xf32>
    %cst_36 = arith.constant 0.000000e+00 : f32
    %178 = vector.broadcast %cst_36 : f32 to vector<2x32xf32>
    %179 = vector.extract_strided_slice %175 {offsets = [0, 0], sizes = [2, 128], strides = [1, 1]} : vector<16x128xf32> to vector<2x128xf32>
    %cst_37 = arith.constant dense<0.000000e+00> : vector<2x128xf32>
    %180 = tpu.matmul %177, %176, %cst_37 {dimension_numbers = #tpu.dot_dimension_numbers<[1], [0], [0], [1], [0, 0, 1, 1], [], []>} : vector<2x32xf32>, vector<32x128xf32>, vector<2x128xf32> -> vector<2x128xf32>
    %181 = arith.addf %179, %180 : vector<2x128xf32>
    %182 = math.tanh %181 : vector<2x128xf32>
    %183 = arith.negf %181 : vector<2x128xf32>
    %184 = math.exp %183 : vector<2x128xf32>
    %cst_38 = arith.constant 1.000000e+00 : f32
    %185 = vector.broadcast %cst_38 : f32 to vector<2x128xf32>
    %186 = arith.addf %185, %184 : vector<2x128xf32>
    %187 = arith.divf %185, %186 : vector<2x128xf32>
    %188 = arith.select %5, %182, %187 : vector<2x128xi1>, vector<2x128xf32>
    %189 = vector.extract_strided_slice %188 {offsets = [0, 0], sizes = [2, 32], strides = [1, 1]} : vector<2x128xf32> to vector<2x32xf32>
    %190 = vector.extract_strided_slice %188 {offsets = [0, 32], sizes = [2, 32], strides = [1, 1]} : vector<2x128xf32> to vector<2x32xf32>
    %191 = vector.extract_strided_slice %188 {offsets = [0, 64], sizes = [2, 32], strides = [1, 1]} : vector<2x128xf32> to vector<2x32xf32>
    %192 = vector.extract_strided_slice %188 {offsets = [0, 96], sizes = [2, 32], strides = [1, 1]} : vector<2x128xf32> to vector<2x32xf32>
    %193 = arith.mulf %190, %178 : vector<2x32xf32>
    %194 = arith.mulf %189, %191 : vector<2x32xf32>
    %195 = arith.addf %193, %194 : vector<2x32xf32>
    %196 = math.tanh %195 : vector<2x32xf32>
    %197 = arith.mulf %192, %196 : vector<2x32xf32>
    %198 = vector.extract_strided_slice %175 {offsets = [2, 0], sizes = [2, 128], strides = [1, 1]} : vector<16x128xf32> to vector<2x128xf32>
    %cst_39 = arith.constant dense<0.000000e+00> : vector<2x128xf32>
    %199 = tpu.matmul %197, %176, %cst_39 {dimension_numbers = #tpu.dot_dimension_numbers<[1], [0], [0], [1], [0, 0, 1, 1], [], []>} : vector<2x32xf32>, vector<32x128xf32>, vector<2x128xf32> -> vector<2x128xf32>
    %200 = arith.addf %198, %199 : vector<2x128xf32>
    %201 = math.tanh %200 : vector<2x128xf32>
    %202 = arith.negf %200 : vector<2x128xf32>
    %203 = math.exp %202 : vector<2x128xf32>
    %cst_40 = arith.constant 1.000000e+00 : f32
    %204 = vector.broadcast %cst_40 : f32 to vector<2x128xf32>
    %205 = arith.addf %204, %203 : vector<2x128xf32>
    %206 = arith.divf %204, %205 : vector<2x128xf32>
    %207 = arith.select %5, %201, %206 : vector<2x128xi1>, vector<2x128xf32>
    %208 = vector.extract_strided_slice %207 {offsets = [0, 0], sizes = [2, 32], strides = [1, 1]} : vector<2x128xf32> to vector<2x32xf32>
    %209 = vector.extract_strided_slice %207 {offsets = [0, 32], sizes = [2, 32], strides = [1, 1]} : vector<2x128xf32> to vector<2x32xf32>
    %210 = vector.extract_strided_slice %207 {offsets = [0, 64], sizes = [2, 32], strides = [1, 1]} : vector<2x128xf32> to vector<2x32xf32>
    %211 = vector.extract_strided_slice %207 {offsets = [0, 96], sizes = [2, 32], strides = [1, 1]} : vector<2x128xf32> to vector<2x32xf32>
    %212 = arith.mulf %209, %195 : vector<2x32xf32>
    %213 = arith.mulf %208, %210 : vector<2x32xf32>
    %214 = arith.addf %212, %213 : vector<2x32xf32>
    %215 = math.tanh %214 : vector<2x32xf32>
    %216 = arith.mulf %211, %215 : vector<2x32xf32>
    %217 = vector.extract_strided_slice %175 {offsets = [4, 0], sizes = [2, 128], strides = [1, 1]} : vector<16x128xf32> to vector<2x128xf32>
    %cst_41 = arith.constant dense<0.000000e+00> : vector<2x128xf32>
    %218 = tpu.matmul %216, %176, %cst_41 {dimension_numbers = #tpu.dot_dimension_numbers<[1], [0], [0], [1], [0, 0, 1, 1], [], []>} : vector<2x32xf32>, vector<32x128xf32>, vector<2x128xf32> -> vector<2x128xf32>
    %219 = arith.addf %217, %218 : vector<2x128xf32>
    %220 = math.tanh %219 : vector<2x128xf32>
    %221 = arith.negf %219 : vector<2x128xf32>
    %222 = math.exp %221 : vector<2x128xf32>
    %cst_42 = arith.constant 1.000000e+00 : f32
    %223 = vector.broadcast %cst_42 : f32 to vector<2x128xf32>
    %224 = arith.addf %223, %222 : vector<2x128xf32>
    %225 = arith.divf %223, %224 : vector<2x128xf32>
    %226 = arith.select %5, %220, %225 : vector<2x128xi1>, vector<2x128xf32>
    %227 = vector.extract_strided_slice %226 {offsets = [0, 0], sizes = [2, 32], strides = [1, 1]} : vector<2x128xf32> to vector<2x32xf32>
    %228 = vector.extract_strided_slice %226 {offsets = [0, 32], sizes = [2, 32], strides = [1, 1]} : vector<2x128xf32> to vector<2x32xf32>
    %229 = vector.extract_strided_slice %226 {offsets = [0, 64], sizes = [2, 32], strides = [1, 1]} : vector<2x128xf32> to vector<2x32xf32>
    %230 = vector.extract_strided_slice %226 {offsets = [0, 96], sizes = [2, 32], strides = [1, 1]} : vector<2x128xf32> to vector<2x32xf32>
    %231 = arith.mulf %228, %214 : vector<2x32xf32>
    %232 = arith.mulf %227, %229 : vector<2x32xf32>
    %233 = arith.addf %231, %232 : vector<2x32xf32>
    %234 = math.tanh %233 : vector<2x32xf32>
    %235 = arith.mulf %230, %234 : vector<2x32xf32>
    %236 = vector.extract_strided_slice %175 {offsets = [6, 0], sizes = [2, 128], strides = [1, 1]} : vector<16x128xf32> to vector<2x128xf32>
    %cst_43 = arith.constant dense<0.000000e+00> : vector<2x128xf32>
    %237 = tpu.matmul %235, %176, %cst_43 {dimension_numbers = #tpu.dot_dimension_numbers<[1], [0], [0], [1], [0, 0, 1, 1], [], []>} : vector<2x32xf32>, vector<32x128xf32>, vector<2x128xf32> -> vector<2x128xf32>
    %238 = arith.addf %236, %237 : vector<2x128xf32>
    %239 = math.tanh %238 : vector<2x128xf32>
    %240 = arith.negf %238 : vector<2x128xf32>
    %241 = math.exp %240 : vector<2x128xf32>
    %cst_44 = arith.constant 1.000000e+00 : f32
    %242 = vector.broadcast %cst_44 : f32 to vector<2x128xf32>
    %243 = arith.addf %242, %241 : vector<2x128xf32>
    %244 = arith.divf %242, %243 : vector<2x128xf32>
    %245 = arith.select %5, %239, %244 : vector<2x128xi1>, vector<2x128xf32>
    %246 = vector.extract_strided_slice %245 {offsets = [0, 0], sizes = [2, 32], strides = [1, 1]} : vector<2x128xf32> to vector<2x32xf32>
    %247 = vector.extract_strided_slice %245 {offsets = [0, 32], sizes = [2, 32], strides = [1, 1]} : vector<2x128xf32> to vector<2x32xf32>
    %248 = vector.extract_strided_slice %245 {offsets = [0, 64], sizes = [2, 32], strides = [1, 1]} : vector<2x128xf32> to vector<2x32xf32>
    %249 = vector.extract_strided_slice %245 {offsets = [0, 96], sizes = [2, 32], strides = [1, 1]} : vector<2x128xf32> to vector<2x32xf32>
    %250 = arith.mulf %247, %233 : vector<2x32xf32>
    %251 = arith.mulf %246, %248 : vector<2x32xf32>
    %252 = arith.addf %250, %251 : vector<2x32xf32>
    %253 = math.tanh %252 : vector<2x32xf32>
    %254 = arith.mulf %249, %253 : vector<2x32xf32>
    %255 = vector.extract_strided_slice %175 {offsets = [8, 0], sizes = [2, 128], strides = [1, 1]} : vector<16x128xf32> to vector<2x128xf32>
    %cst_45 = arith.constant dense<0.000000e+00> : vector<2x128xf32>
    %256 = tpu.matmul %254, %176, %cst_45 {dimension_numbers = #tpu.dot_dimension_numbers<[1], [0], [0], [1], [0, 0, 1, 1], [], []>} : vector<2x32xf32>, vector<32x128xf32>, vector<2x128xf32> -> vector<2x128xf32>
    %257 = arith.addf %255, %256 : vector<2x128xf32>
    %258 = math.tanh %257 : vector<2x128xf32>
    %259 = arith.negf %257 : vector<2x128xf32>
    %260 = math.exp %259 : vector<2x128xf32>
    %cst_46 = arith.constant 1.000000e+00 : f32
    %261 = vector.broadcast %cst_46 : f32 to vector<2x128xf32>
    %262 = arith.addf %261, %260 : vector<2x128xf32>
    %263 = arith.divf %261, %262 : vector<2x128xf32>
    %264 = arith.select %5, %258, %263 : vector<2x128xi1>, vector<2x128xf32>
    %265 = vector.extract_strided_slice %264 {offsets = [0, 0], sizes = [2, 32], strides = [1, 1]} : vector<2x128xf32> to vector<2x32xf32>
    %266 = vector.extract_strided_slice %264 {offsets = [0, 32], sizes = [2, 32], strides = [1, 1]} : vector<2x128xf32> to vector<2x32xf32>
    %267 = vector.extract_strided_slice %264 {offsets = [0, 64], sizes = [2, 32], strides = [1, 1]} : vector<2x128xf32> to vector<2x32xf32>
    %268 = vector.extract_strided_slice %264 {offsets = [0, 96], sizes = [2, 32], strides = [1, 1]} : vector<2x128xf32> to vector<2x32xf32>
    %269 = arith.mulf %266, %252 : vector<2x32xf32>
    %270 = arith.mulf %265, %267 : vector<2x32xf32>
    %271 = arith.addf %269, %270 : vector<2x32xf32>
    %272 = math.tanh %271 : vector<2x32xf32>
    %273 = arith.mulf %268, %272 : vector<2x32xf32>
    %274 = vector.extract_strided_slice %175 {offsets = [10, 0], sizes = [2, 128], strides = [1, 1]} : vector<16x128xf32> to vector<2x128xf32>
    %cst_47 = arith.constant dense<0.000000e+00> : vector<2x128xf32>
    %275 = tpu.matmul %273, %176, %cst_47 {dimension_numbers = #tpu.dot_dimension_numbers<[1], [0], [0], [1], [0, 0, 1, 1], [], []>} : vector<2x32xf32>, vector<32x128xf32>, vector<2x128xf32> -> vector<2x128xf32>
    %276 = arith.addf %274, %275 : vector<2x128xf32>
    %277 = math.tanh %276 : vector<2x128xf32>
    %278 = arith.negf %276 : vector<2x128xf32>
    %279 = math.exp %278 : vector<2x128xf32>
    %cst_48 = arith.constant 1.000000e+00 : f32
    %280 = vector.broadcast %cst_48 : f32 to vector<2x128xf32>
    %281 = arith.addf %280, %279 : vector<2x128xf32>
    %282 = arith.divf %280, %281 : vector<2x128xf32>
    %283 = arith.select %5, %277, %282 : vector<2x128xi1>, vector<2x128xf32>
    %284 = vector.extract_strided_slice %283 {offsets = [0, 0], sizes = [2, 32], strides = [1, 1]} : vector<2x128xf32> to vector<2x32xf32>
    %285 = vector.extract_strided_slice %283 {offsets = [0, 32], sizes = [2, 32], strides = [1, 1]} : vector<2x128xf32> to vector<2x32xf32>
    %286 = vector.extract_strided_slice %283 {offsets = [0, 64], sizes = [2, 32], strides = [1, 1]} : vector<2x128xf32> to vector<2x32xf32>
    %287 = vector.extract_strided_slice %283 {offsets = [0, 96], sizes = [2, 32], strides = [1, 1]} : vector<2x128xf32> to vector<2x32xf32>
    %288 = arith.mulf %285, %271 : vector<2x32xf32>
    %289 = arith.mulf %284, %286 : vector<2x32xf32>
    %290 = arith.addf %288, %289 : vector<2x32xf32>
    %291 = math.tanh %290 : vector<2x32xf32>
    %292 = arith.mulf %287, %291 : vector<2x32xf32>
    %293 = vector.extract_strided_slice %175 {offsets = [12, 0], sizes = [2, 128], strides = [1, 1]} : vector<16x128xf32> to vector<2x128xf32>
    %cst_49 = arith.constant dense<0.000000e+00> : vector<2x128xf32>
    %294 = tpu.matmul %292, %176, %cst_49 {dimension_numbers = #tpu.dot_dimension_numbers<[1], [0], [0], [1], [0, 0, 1, 1], [], []>} : vector<2x32xf32>, vector<32x128xf32>, vector<2x128xf32> -> vector<2x128xf32>
    %295 = arith.addf %293, %294 : vector<2x128xf32>
    %296 = math.tanh %295 : vector<2x128xf32>
    %297 = arith.negf %295 : vector<2x128xf32>
    %298 = math.exp %297 : vector<2x128xf32>
    %cst_50 = arith.constant 1.000000e+00 : f32
    %299 = vector.broadcast %cst_50 : f32 to vector<2x128xf32>
    %300 = arith.addf %299, %298 : vector<2x128xf32>
    %301 = arith.divf %299, %300 : vector<2x128xf32>
    %302 = arith.select %5, %296, %301 : vector<2x128xi1>, vector<2x128xf32>
    %303 = vector.extract_strided_slice %302 {offsets = [0, 0], sizes = [2, 32], strides = [1, 1]} : vector<2x128xf32> to vector<2x32xf32>
    %304 = vector.extract_strided_slice %302 {offsets = [0, 32], sizes = [2, 32], strides = [1, 1]} : vector<2x128xf32> to vector<2x32xf32>
    %305 = vector.extract_strided_slice %302 {offsets = [0, 64], sizes = [2, 32], strides = [1, 1]} : vector<2x128xf32> to vector<2x32xf32>
    %306 = vector.extract_strided_slice %302 {offsets = [0, 96], sizes = [2, 32], strides = [1, 1]} : vector<2x128xf32> to vector<2x32xf32>
    %307 = arith.mulf %304, %290 : vector<2x32xf32>
    %308 = arith.mulf %303, %305 : vector<2x32xf32>
    %309 = arith.addf %307, %308 : vector<2x32xf32>
    %310 = math.tanh %309 : vector<2x32xf32>
    %311 = arith.mulf %306, %310 : vector<2x32xf32>
    %312 = vector.extract_strided_slice %175 {offsets = [14, 0], sizes = [2, 128], strides = [1, 1]} : vector<16x128xf32> to vector<2x128xf32>
    %cst_51 = arith.constant dense<0.000000e+00> : vector<2x128xf32>
    %313 = tpu.matmul %311, %176, %cst_51 {dimension_numbers = #tpu.dot_dimension_numbers<[1], [0], [0], [1], [0, 0, 1, 1], [], []>} : vector<2x32xf32>, vector<32x128xf32>, vector<2x128xf32> -> vector<2x128xf32>
    %314 = arith.addf %312, %313 : vector<2x128xf32>
    %315 = math.tanh %314 : vector<2x128xf32>
    %316 = arith.negf %314 : vector<2x128xf32>
    %317 = math.exp %316 : vector<2x128xf32>
    %cst_52 = arith.constant 1.000000e+00 : f32
    %318 = vector.broadcast %cst_52 : f32 to vector<2x128xf32>
    %319 = arith.addf %318, %317 : vector<2x128xf32>
    %320 = arith.divf %318, %319 : vector<2x128xf32>
    %321 = arith.select %5, %315, %320 : vector<2x128xi1>, vector<2x128xf32>
    %322 = vector.extract_strided_slice %321 {offsets = [0, 0], sizes = [2, 32], strides = [1, 1]} : vector<2x128xf32> to vector<2x32xf32>
    %323 = vector.extract_strided_slice %321 {offsets = [0, 32], sizes = [2, 32], strides = [1, 1]} : vector<2x128xf32> to vector<2x32xf32>
    %324 = vector.extract_strided_slice %321 {offsets = [0, 64], sizes = [2, 32], strides = [1, 1]} : vector<2x128xf32> to vector<2x32xf32>
    %325 = vector.extract_strided_slice %321 {offsets = [0, 96], sizes = [2, 32], strides = [1, 1]} : vector<2x128xf32> to vector<2x32xf32>
    %326 = arith.mulf %323, %309 : vector<2x32xf32>
    %327 = arith.mulf %322, %324 : vector<2x32xf32>
    %328 = arith.addf %326, %327 : vector<2x32xf32>
    %329 = math.tanh %328 : vector<2x32xf32>
    %330 = arith.mulf %325, %329 : vector<2x32xf32>
    %c1 = arith.constant 1 : index
    %c0_53 = arith.constant 0 : index
    %c0_54 = arith.constant 0 : index
    %331 = vector.load %arg13[%c1, %c0_53, %c0_54] : memref<2x2x32xf32, #tpu.memory_space<vmem>>, vector<1x2x32xf32>
    %332 = vector.shape_cast %331 : vector<1x2x32xf32> to vector<2x32xf32>
    %333 = vector.shape_cast %328 : vector<2x32xf32> to vector<1x2x32xf32>
    tpu.vector_store %arg13[%c1, %c0_53, %c0_54], %333 {strides = array<i32>} : memref<2x2x32xf32, #tpu.memory_space<vmem>>, vector<1x2x32xf32>,
    %334 = vector.extract_strided_slice %166 {offsets = [0, 0], sizes = [1, 32], strides = [1, 1]} : vector<2x32xf32> to vector<1x32xf32>
    %335 = vector.extract_strided_slice %166 {offsets = [1, 0], sizes = [1, 32], strides = [1, 1]} : vector<2x32xf32> to vector<1x32xf32>
    %336 = tpu.concatenate %334, %335 in 1 : vector<1x32xf32>, vector<1x32xf32> -> vector<1x64xf32>
    %337 = vector.extract_strided_slice %330 {offsets = [0, 0], sizes = [1, 32], strides = [1, 1]} : vector<2x32xf32> to vector<1x32xf32>
    %338 = vector.extract_strided_slice %330 {offsets = [1, 0], sizes = [1, 32], strides = [1, 1]} : vector<2x32xf32> to vector<1x32xf32>
    %339 = tpu.concatenate %337, %338 in 1 : vector<1x32xf32>, vector<1x32xf32> -> vector<1x64xf32>
    %340 = tpu.concatenate %336, %339 in 0 : vector<1x64xf32>, vector<1x64xf32> -> vector<2x64xf32>
    %c0_55 = arith.constant 0 : index
    %c0_56 = arith.constant 0 : index
    %341 = vector.load %arg7[%c0_55, %c0_56] : memref<64x64xf32, #tpu.memory_space<vmem>>, vector<64x64xf32>
    %cst_57 = arith.constant dense<0.000000e+00> : vector<2x64xf32>
    %342 = tpu.matmul %340, %341, %cst_57 {dimension_numbers = #tpu.dot_dimension_numbers<[1], [0], [0], [1], [0, 0, 1, 1], [], []>} : vector<2x64xf32>, vector<64x64xf32>, vector<2x64xf32> -> vector<2x64xf32>
    %c0_58 = arith.constant 0 : index
    %c0_59 = arith.constant 0 : index
    %343 = vector.load %arg8[%c0_58, %c0_59] : memref<1x64xf32, #tpu.memory_space<vmem>>, vector<1x64xf32>
    %344 = vector.broadcast %343 : vector<1x64xf32> to vector<2x64xf32>
    %345 = arith.addf %342, %344 : vector<2x64xf32>
    %346 = vector.extract_strided_slice %345 {offsets = [0, 0], sizes = [2, 32], strides = [1, 1]} : vector<2x64xf32> to vector<2x32xf32>
    %347 = vector.extract_strided_slice %345 {offsets = [0, 32], sizes = [2, 32], strides = [1, 1]} : vector<2x64xf32> to vector<2x32xf32>
    %c0_60 = arith.constant 0 : index
    %c0_61 = arith.constant 0 : index
    %348 = vector.load %arg10[%c0_60, %c0_61] : memref<2x32xf32, #tpu.memory_space<vmem>>, vector<2x32xf32>
    tpu.vector_store %arg10[%c0_60, %c0_61], %346 {strides = array<i32>} : memref<2x32xf32, #tpu.memory_space<vmem>>, vector<2x32xf32>,
    %c0_62 = arith.constant 0 : index
    %c0_63 = arith.constant 0 : index
    %349 = vector.load %arg11[%c0_62, %c0_63] : memref<2x32xf32, #tpu.memory_space<vmem>>, vector<2x32xf32>
    tpu.vector_store %arg11[%c0_62, %c0_63], %347 {strides = array<i32>} : memref<2x32xf32, #tpu.memory_space<vmem>>, vector<2x32xf32>,
    %cst_64 = arith.constant 5.000000e-01 : f32
    %350 = vector.broadcast %cst_64 : f32 to vector<2x32xf32>
    %351 = arith.mulf %350, %347 : vector<2x32xf32>
    %352 = math.exp %351 : vector<2x32xf32>
    %c0_65 = arith.constant 0 : index
    %c0_66 = arith.constant 0 : index
    %c0_67 = arith.constant 0 : index
    %353 = vector.load %arg9[%c0_65, %c0_66, %c0_67] : memref<2x2x32xf32, #tpu.memory_space<vmem>>, vector<1x2x32xf32>
    %354 = vector.shape_cast %353 : vector<1x2x32xf32> to vector<2x32xf32>
    %355 = arith.mulf %354, %352 : vector<2x32xf32>
    %356 = arith.addf %355, %346 : vector<2x32xf32>
    %c0_68 = arith.constant 0 : index
    %c0_69 = arith.constant 0 : index
    %c0_70 = arith.constant 0 : index
    %357 = vector.load %arg12[%c0_68, %c0_69, %c0_70] : memref<2x2x32xf32, #tpu.memory_space<vmem>>, vector<1x2x32xf32>
    %358 = vector.shape_cast %357 : vector<1x2x32xf32> to vector<2x32xf32>
    %359 = vector.shape_cast %356 : vector<2x32xf32> to vector<1x2x32xf32>
    tpu.vector_store %arg12[%c0_68, %c0_69, %c0_70], %359 {strides = array<i32>} : memref<2x2x32xf32, #tpu.memory_space<vmem>>, vector<1x2x32xf32>,
    %c1_71 = arith.constant 1 : index
    %c0_72 = arith.constant 0 : index
    %c0_73 = arith.constant 0 : index
    %360 = vector.load %arg9[%c1_71, %c0_72, %c0_73] : memref<2x2x32xf32, #tpu.memory_space<vmem>>, vector<1x2x32xf32>
    %361 = vector.shape_cast %360 : vector<1x2x32xf32> to vector<2x32xf32>
    %362 = arith.mulf %361, %352 : vector<2x32xf32>
    %363 = arith.addf %362, %346 : vector<2x32xf32>
    %c1_74 = arith.constant 1 : index
    %c0_75 = arith.constant 0 : index
    %c0_76 = arith.constant 0 : index
    %364 = vector.load %arg12[%c1_74, %c0_75, %c0_76] : memref<2x2x32xf32, #tpu.memory_space<vmem>>, vector<1x2x32xf32>
    %365 = vector.shape_cast %364 : vector<1x2x32xf32> to vector<2x32xf32>
    %366 = vector.shape_cast %363 : vector<2x32xf32> to vector<1x2x32xf32>
    tpu.vector_store %arg12[%c1_74, %c0_75, %c0_76], %366 {strides = array<i32>} : memref<2x2x32xf32, #tpu.memory_space<vmem>>, vector<1x2x32xf32>,
    return
  }
}

</mosaic_0001>

<llo_original>
// kernel: tpu_custom_call.1
$region0: #{tpu_custom_call.1}
  #allocation0 [shape = 'u32[]', space=smem, size = 0x4, offset = 0x4, fixed_abs, tag = 'smem constant byte address 0x4 - core index']
  #allocation1 [shape = 'u32[72,128]{1,0:T(1,128)}', space=vmem, size = 0x9000, scoped, tag = 'internal scratch']
  %s0 = inlined_call_operand.vmem [shape: f32[16,4], index: 0, kind: input, shape index: {}]
  %s1 = inlined_call_operand.vmem [shape: f32[4,128], index: 1, kind: input, shape index: {}]
  %s2 = inlined_call_operand.hbm [shape: f32[32,128], index: 2, kind: input, shape index: {}]
  %s3 = inlined_call_operand.hbm [shape: f32[32,128], index: 3, kind: input, shape index: {}]
  %s4 = inlined_call_operand.hbm [shape: f32[32,128], index: 4, kind: input, shape index: {}]
  %s5 = inlined_call_operand.vmem [shape: f32[1,128], index: 5, kind: input, shape index: {}]
  %s6 = inlined_call_operand.vmem [shape: f32[1,128], index: 6, kind: input, shape index: {}]
  %s7 = inlined_call_operand.hbm [shape: f32[64,64], index: 7, kind: input, shape index: {}]
  %s8 = inlined_call_operand.vmem [shape: f32[1,64], index: 8, kind: input, shape index: {}]
  %s9 = inlined_call_operand.vmem [shape: f32[2,2,32], index: 9, kind: input, shape index: {}]
  %s10 = inlined_call_operand.hbm [shape: f32[2,32], index: 10, kind: output, shape index: {0}]
  %s11 = inlined_call_operand.hbm [shape: f32[2,32], index: 11, kind: output, shape index: {1}]
  %s12 = inlined_call_operand.hbm [shape: f32[2,2,32], index: 12, kind: output, shape index: {2}]
  %s13 = inlined_call_operand.hbm [shape: f32[2,2,32], index: 13, kind: output, shape index: {3}]
  %14 = xla_tuple %s10, %s11, %s12, %s13
  %s15 = sld [smem:[#allocation0]]
  $region90: #{tpu_custom_call.1} parent=0
    _
  %s17 = ssub.s32 1, %s15
  %s18 = scalar_select 0, %s17, %s15
  $region1: #{tpu_custom_call.1} parent=0
    #allocation2 [shape = 'u8[16384]{0}', space=vmem, size = 0x4000, scoped, tag = 'input window, operand 2, single buffered']
    #allocation3 [shape = 's32[1]{0}', space=sflag, size = 0x4, scoped, tag = 'scoped memory for tpu_custom_call.1']
    #allocation4 [shape = 's32[1]{0}', space=sflag, size = 0x4, scoped, tag = 'scoped memory for tpu_custom_call.1']
    #allocation5 [shape = 'u8[16384]{0}', space=vmem, size = 0x4000, scoped, tag = 'input window, operand 3, single buffered']
    #allocation6 [shape = 's32[1]{0}', space=sflag, size = 0x4, scoped, tag = 'scoped memory for tpu_custom_call.1']
    #allocation7 [shape = 'u8[16384]{0}', space=vmem, size = 0x4000, scoped, tag = 'input window, operand 4, single buffered']
    #allocation8 [shape = 'u8[32768]{0}', space=vmem, size = 0x8000, scoped, tag = 'input window, operand 7, single buffered']
    #allocation9 [shape = 's32[1]{0}', space=sflag, size = 0x4, scoped, tag = 'scoped memory for tpu_custom_call.1']
    #allocation10 [shape = 'u8[1024]{0}', space=vmem, size = 0x400, scoped, tag = 'output window, operand 0, single buffered']
    #allocation11 [shape = 'u8[1024]{0}', space=vmem, size = 0x400, scoped, tag = 'output window, operand 1, single buffered']
    #allocation12 [shape = 's32[1]{0}', space=sflag, size = 0x4, scoped, tag = 'scoped memory for tpu_custom_call.1']
    #allocation13 [shape = 'u8[2048]{0}', space=vmem, size = 0x800, scoped, tag = 'output window, operand 2, single buffered']
    #allocation14 [shape = 'u8[2048]{0}', space=vmem, size = 0x800, scoped, tag = 'output window, operand 3, single buffered']
    #allocation15 [shape = 's32[1]{0}', space=sflag, size = 0x4, scoped, tag = 'scoped memory for tpu_custom_call.1']
    %19 = vsyncpa [#allocation3], 0
    %20 = vsyncpa [#allocation6], 0
    %21 = vsyncpa [#allocation9], 0
    %22 = vsyncpa [#allocation4], 0
    %23 = vsyncpa [#allocation12], 0
    %24 = vsyncpa [#allocation15], 0
    // Predicated region
    $region2: #{tpu_custom_call.1} parent=1 // pred_check
      _
    $region3: #{tpu_custom_call.1} parent=1 // pred_check_branch
      %26 = sbr.rel (0) target = $region5
    $region4: #{tpu_custom_call.1} parent=1 // pred_region
      _
    $region5: #{tpu_custom_call.1} parent=1 // pred_fallthru
      _
    // Predicated region
    $region6: #{tpu_custom_call.1} parent=1 // pred_check
      _
    $region7: #{tpu_custom_call.1} parent=1 // pred_check_branch
      %28 = sbr.rel (0) target = $region9
    $region8: #{tpu_custom_call.1} parent=1 // pred_region
      _
    $region9: #{tpu_custom_call.1} parent=1 // pred_fallthru
      _
    // Predicated region
    $region10: #{tpu_custom_call.1} parent=1 // pred_check
      _
    $region11: #{tpu_custom_call.1} parent=1 // pred_check_branch
      %30 = sbr.rel (0) target = $region13
    $region12: #{tpu_custom_call.1} parent=1 // pred_region
      %32 = vsyncadd [#allocation3], 0
      %s33 = sshll.u32 %s2, 4
      %s34 = int_to_ptr.hbm [resolvable:$true] %s33
      %s35 = sshll.u32 [#allocation2], 4
      %s36 = int_to_ptr.vmem [resolvable:$true] %s35
      %41 = dma.hbm_to_vmem [thread:$0]  %s34, 512, %s36, [#allocation3], 128, 128, 8
    $region13: #{tpu_custom_call.1} parent=1 // pred_fallthru
      _
    // Predicated region
    $region14: #{tpu_custom_call.1} parent=1 // pred_check
      _
    $region15: #{tpu_custom_call.1} parent=1 // pred_check_branch
      %43 = sbr.rel (0) target = $region17
    $region16: #{tpu_custom_call.1} parent=1 // pred_region
      %45 = vsyncadd [#allocation6], 0
      %s46 = sshll.u32 %s3, 4
      %s47 = int_to_ptr.hbm [resolvable:$true] %s46
      %s48 = sshll.u32 [#allocation5], 4
      %s49 = int_to_ptr.vmem [resolvable:$true] %s48
      %54 = dma.hbm_to_vmem [thread:$0]  %s47, 512, %s49, [#allocation6], 128, 128, 8
    $region17: #{tpu_custom_call.1} parent=1 // pred_fallthru
      _
    // Predicated region
    $region18: #{tpu_custom_call.1} parent=1 // pred_check
      _
    $region19: #{tpu_custom_call.1} parent=1 // pred_check_branch
      %56 = sbr.rel (0) target = $region21
    $region20: #{tpu_custom_call.1} parent=1 // pred_region
      %58 = vsyncadd [#allocation6], 0
      %s59 = sshll.u32 %s4, 4
      %s60 = int_to_ptr.hbm [resolvable:$true] %s59
      %s61 = sshll.u32 [#allocation7], 4
      %s62 = int_to_ptr.vmem [resolvable:$true] %s61
      %67 = dma.hbm_to_vmem [thread:$0]  %s60, 512, %s62, [#allocation6], 128, 128, 8
    $region21: #{tpu_custom_call.1} parent=1 // pred_fallthru
      _
    // Predicated region
    $region22: #{tpu_custom_call.1} parent=1 // pred_check
      _
    $region23: #{tpu_custom_call.1} parent=1 // pred_check_branch
      %69 = sbr.rel (0) target = $region25
    $region24: #{tpu_custom_call.1} parent=1 // pred_region
      _
    $region25: #{tpu_custom_call.1} parent=1 // pred_fallthru
      _
    // Predicated region
    $region26: #{tpu_custom_call.1} parent=1 // pred_check
      _
    $region27: #{tpu_custom_call.1} parent=1 // pred_check_branch
      %71 = sbr.rel (0) target = $region29
    $region28: #{tpu_custom_call.1} parent=1 // pred_region
      _
    $region29: #{tpu_custom_call.1} parent=1 // pred_fallthru
      _
    // Predicated region
    $region30: #{tpu_custom_call.1} parent=1 // pred_check
      _
    $region31: #{tpu_custom_call.1} parent=1 // pred_check_branch
      %73 = sbr.rel (0) target = $region33
    $region32: #{tpu_custom_call.1} parent=1 // pred_region
      %75 = vsyncadd [#allocation9], 0
      %s76 = sshll.u32 %s7, 4
      %s77 = int_to_ptr.hbm [resolvable:$true] %s76
      %s78 = sshll.u32 [#allocation8], 4
      %s79 = int_to_ptr.vmem [resolvable:$true] %s78
      %84 = dma.hbm_to_vmem [thread:$0]  %s77, 1024, %s79, [#allocation9], 128, 128, 8
    $region33: #{tpu_custom_call.1} parent=1 // pred_fallthru
      _
    // Predicated region
    $region34: #{tpu_custom_call.1} parent=1 // pred_check
      _
    $region35: #{tpu_custom_call.1} parent=1 // pred_check_branch
      %86 = sbr.rel (0) target = $region37
    $region36: #{tpu_custom_call.1} parent=1 // pred_region
      _
    $region37: #{tpu_custom_call.1} parent=1 // pred_fallthru
      _
    // Predicated region
    $region38: #{tpu_custom_call.1} parent=1 // pred_check
      _
    $region39: #{tpu_custom_call.1} parent=1 // pred_check_branch
      %88 = sbr.rel (0) target = $region41
    $region40: #{tpu_custom_call.1} parent=1 // pred_region
      _
    $region41: #{tpu_custom_call.1} parent=1 // pred_fallthru
      _
    // Predicated region
    $region42: #{tpu_custom_call.1} parent=1 // pred_check
      _
    $region43: #{tpu_custom_call.1} parent=1 // pred_check_branch
      %90 = sbr.rel (0) target = $region45
    $region44: #{tpu_custom_call.1} parent=1 // pred_region
      %92 = dma.done [#allocation3], 512
    $region45: #{tpu_custom_call.1} parent=1 // pred_fallthru
      _
    // Predicated region
    $region46: #{tpu_custom_call.1} parent=1 // pred_check
      _
    $region47: #{tpu_custom_call.1} parent=1 // pred_check_branch
      %94 = sbr.rel (0) target = $region49
    $region48: #{tpu_custom_call.1} parent=1 // pred_region
      %96 = dma.done [#allocation6], 512
    $region49: #{tpu_custom_call.1} parent=1 // pred_fallthru
      _
    // Predicated region
    $region50: #{tpu_custom_call.1} parent=1 // pred_check
      _
    $region51: #{tpu_custom_call.1} parent=1 // pred_check_branch
      %98 = sbr.rel (0) target = $region53
    $region52: #{tpu_custom_call.1} parent=1 // pred_region
      %100 = dma.done [#allocation6], 512
    $region53: #{tpu_custom_call.1} parent=1 // pred_fallthru
      _
    // Predicated region
    $region54: #{tpu_custom_call.1} parent=1 // pred_check
      _
    $region55: #{tpu_custom_call.1} parent=1 // pred_check_branch
      %102 = sbr.rel (0) target = $region57
    $region56: #{tpu_custom_call.1} parent=1 // pred_region
      %104 = dma.done [#allocation9], 1024
    $region57: #{tpu_custom_call.1} parent=1 // pred_fallthru
      _
    %v105 = vlaneseq
    %v106 = vand.u32 %v105, 127
    %vm107 = vcmp.ge.s32.totalorder %v106, 64
    %vm108 = vcmp.lt.s32.totalorder %v106, 96
    %vm109 = vmand %vm107, %vm108
    %v110 = vld [vmem:[%s0] sm:$0xff]
    %v111 = vld [vmem:[%s0 + $0x8] sm:$0xff]
    %v112 = vld [vmem:[%s1] sm:$0xf]
    %v113 = vld [vmem:[%s5] sm:$0x1]
    %v115 = vperm.slane %v113, 0
    %vm117 = vcmask 31744
    %v119 = vsel %vm117, %v110, 0
    %v122 = vsel %vm117, %v111, 0
    %vm124 = vcmask 1043456
    %v126 = vsel %vm124, %v112, 0
    %128 = vmatpush.msra.mxu0 0.0
    %129 = vmatpush.msra.mxu0 0.0
    %130 = vmatpush.msra.mxu0 0.0
    %131 = vmatpush.msra.mxu0 0.0
    %132 = vmatpush.msra.mxu0 0.0
    %133 = vmatpush.msra.mxu0 0.0
    %134 = vmatpush.msra.mxu0 0.0
    %135 = vmatpush.msra.mxu0 0.0
    %136 = vmatpush.msra.mxu0 0.0
    %137 = vmatpush.msra.mxu0 0.0
    %138 = vmatpush.msra.mxu0 0.0
    %139 = vmatpush.msra.mxu0 0.0
    %140 = vmatpush.msra.mxu0 0.0
    %141 = vmatpush.msra.mxu0 0.0
    %142 = vmatpush.msra.mxu0 0.0
    %143 = vmatpush.msra.mxu0 %v126
    %144 = vmatmul.f32.gmra.mxu0 %v119
    %v145 = vpop.f32.mrf.mxu0
    %v146 = vadd.f32 %v115, %v145
    %147 = vmatmul.f32.gmra.mxu0 %v122
    %v148 = vpop.f32.mrf.mxu0
    %v149 = vadd.f32 %v115, %v148
    %150 = vdwg.mxu0
    %v151 = vld [vmem:[#allocation5] sm:$0xff]
    %v152 = vld [vmem:[#allocation5 + $0x8] sm:$0xff]
    %v153 = vld [vmem:[#allocation5 + $0x10] sm:$0xff]
    %v154 = vld [vmem:[#allocation5 + $0x18] sm:$0xff]
    %vm155 = vcmask 261120
    %v157 = vsel %vm155, 0.0, 0
    %159 = vmatpush.msra.mxu0 0.0
    %160 = vmatpush.msra.mxu0 0.0
    %161 = vmatpush.msra.mxu0 0.0
    %162 = vmatpush.msra.mxu0 0.0
    %163 = vmatpush.msra.mxu0 0.0
    %164 = vmatpush.msra.mxu0 0.0
    %165 = vmatpush.msra.mxu0 0.0
    %166 = vmatpush.msra.mxu0 0.0
    %167 = vmatpush.msra.mxu0 0.0
    %168 = vmatpush.msra.mxu0 0.0
    %169 = vmatpush.msra.mxu0 0.0
    %170 = vmatpush.msra.mxu0 0.0
    %171 = vmatpush.msra.mxu0 %v154
    %172 = vmatpush.msra.mxu0 %v153
    %173 = vmatpush.msra.mxu0 %v152
    %174 = vmatpush.msra.mxu0 %v151
    %175 = vmatmul.f32.gmra.mxu0 %v157
    %v176 = vpop.f32.mrf.mxu0
    %v177 = vadd.f32 0.0, %v176
    %178 = vdwg.mxu0
    %v179 = vadd.f32 %v146, %v177
    %v180 = vtanh.pop %v179
    %v181 = vxor.u32 %v179, 2147483648
    %v182 = vmul.f32 %v181, 1.442695
    %v183 = vpow.pop %v182
    %v184 = vadd.f32 %v183, 1.0
    %v185 = vrcp.pop %v184
    %v186 = vmul.f32 %v184, %v185
    %v187 = vsub.f32 1.0, %v186
    %v188 = vmul.f32 %v185, %v187
    %v189 = vadd.f32 %v185, %v188
    %vm190 = vweird.f32 %v184
    %vm191 = vweird.f32 %v185
    %vm192 = vmor %vm190, %vm191
    %v193 = vsel %vm192, %v185, %v189
    %v194 = vand.u32 2147483647, %v184
    %vm195 = vcmp.eq.f32.partialorder %v194, 8.507059e+37
    %v196 = vand.u32 %v184, 2147483648
    %v197 = vor.u32 1.1754944e-38, %v196
    %v198 = vsel %vm195, %v197, %v193
    %v199 = vmul.f32 1.0, %v198
    %v200 = vsel %vm109, %v180, %v199
    %v201 = vmul.f32 %v200, 0.0
    %203 = vrot.lane.b32.xlu0 %v200, 64
    %v204 = vpop.permute.xlu0 %203
    %v206 = vmul.f32 %v200, %v204
    %208 = vrot.lane.b32.xlu0 %v206, 32
    %v209 = vpop.permute.xlu0 %208
    %v211 = vadd.f32 %v201, %v209
    %v212 = vtanh.pop %v211
    %214 = vrot.lane.b32.xlu0 %v212, 64
    %v215 = vpop.permute.xlu0 %214
    %v217 = vmul.f32 %v200, %v215
    %219 = vrot.lane.b32.xlu0 %v217, 32
    %v220 = vpop.permute.xlu0 %219
    %v221 = vsel %vm155, %v220, 0
    %223 = vmatpush.msra.mxu0 0.0
    %224 = vmatpush.msra.mxu0 0.0
    %225 = vmatpush.msra.mxu0 0.0
    %226 = vmatpush.msra.mxu0 0.0
    %227 = vmatpush.msra.mxu0 0.0
    %228 = vmatpush.msra.mxu0 0.0
    %229 = vmatpush.msra.mxu0 0.0
    %230 = vmatpush.msra.mxu0 0.0
    %231 = vmatpush.msra.mxu0 0.0
    %232 = vmatpush.msra.mxu0 0.0
    %233 = vmatpush.msra.mxu0 0.0
    %234 = vmatpush.msra.mxu0 0.0
    %235 = vmatpush.msra.mxu0 %v154
    %236 = vmatpush.msra.mxu0 %v153
    %237 = vmatpush.msra.mxu0 %v152
    %238 = vmatpush.msra.mxu0 %v151
    %239 = vmatmul.f32.gmra.mxu0 %v221
    %v240 = vpop.f32.mrf.mxu0
    %v241 = vadd.f32 0.0, %v240
    %242 = vdwg.mxu0
    %v244 = vrot.slane %v241, 6
    %v246 = vadd.f32 %v146, %v244
    %v247 = vtanh.pop %v246
    %v248 = vxor.u32 %v246, 2147483648
    %v249 = vmul.f32 %v248, 1.442695
    %v250 = vpow.pop %v249
    %v251 = vadd.f32 %v250, 1.0
    %v252 = vrcp.pop %v251
    %v253 = vmul.f32 %v251, %v252
    %v254 = vsub.f32 1.0, %v253
    %v255 = vmul.f32 %v252, %v254
    %v256 = vadd.f32 %v252, %v255
    %vm257 = vweird.f32 %v251
    %vm258 = vweird.f32 %v252
    %vm259 = vmor %vm257, %vm258
    %v260 = vsel %vm259, %v252, %v256
    %v261 = vand.u32 2147483647, %v251
    %vm262 = vcmp.eq.f32.partialorder %v261, 8.507059e+37
    %v263 = vand.u32 %v251, 2147483648
    %v264 = vor.u32 1.1754944e-38, %v263
    %v265 = vsel %vm262, %v264, %v260
    %v266 = vmul.f32 1.0, %v265
    %v267 = vsel %vm109, %v247, %v266
    %v269 = vrot.slane %v211, 6
    %v271 = vmul.f32 %v267, %v269
    %273 = vrot.lane.b32.xlu0 %v267, 64
    %v274 = vpop.permute.xlu0 %273
    %v276 = vmul.f32 %v267, %v274
    %278 = vrot.lane.b32.xlu0 %v276, 32
    %v279 = vpop.permute.xlu0 %278
    %v281 = vadd.f32 %v271, %v279
    %v282 = vtanh.pop %v281
    %284 = vrot.lane.b32.xlu0 %v282, 64
    %v285 = vpop.permute.xlu0 %284
    %v287 = vmul.f32 %v267, %v285
    %v289 = vrot.slane %v287, 2
    %290 = vrot.lane.b32.xlu0 %v289, 32
    %v291 = vpop.permute.xlu0 %290
    %v292 = vsel %vm155, %v291, 0
    %294 = vmatpush.msra.mxu0 0.0
    %295 = vmatpush.msra.mxu0 0.0
    %296 = vmatpush.msra.mxu0 0.0
    %297 = vmatpush.msra.mxu0 0.0
    %298 = vmatpush.msra.mxu0 0.0
    %299 = vmatpush.msra.mxu0 0.0
    %300 = vmatpush.msra.mxu0 0.0
    %301 = vmatpush.msra.mxu0 0.0
    %302 = vmatpush.msra.mxu0 0.0
    %303 = vmatpush.msra.mxu0 0.0
    %304 = vmatpush.msra.mxu0 0.0
    %305 = vmatpush.msra.mxu0 0.0
    %306 = vmatpush.msra.mxu0 %v154
    %307 = vmatpush.msra.mxu0 %v153
    %308 = vmatpush.msra.mxu0 %v152
    %309 = vmatpush.msra.mxu0 %v151
    %310 = vmatmul.f32.gmra.mxu0 %v292
    %v311 = vpop.f32.mrf.mxu0
    %v312 = vadd.f32 0.0, %v311
    %313 = vdwg.mxu0
    %v315 = vrot.slane %v312, 4
    %v317 = vadd.f32 %v146, %v315
    %v318 = vtanh.pop %v317
    %v319 = vxor.u32 %v317, 2147483648
    %v320 = vmul.f32 %v319, 1.442695
    %v321 = vpow.pop %v320
    %v322 = vadd.f32 %v321, 1.0
    %v323 = vrcp.pop %v322
    %v324 = vmul.f32 %v322, %v323
    %v325 = vsub.f32 1.0, %v324
    %v326 = vmul.f32 %v323, %v325
    %v327 = vadd.f32 %v323, %v326
    %vm328 = vweird.f32 %v322
    %vm329 = vweird.f32 %v323
    %vm330 = vmor %vm328, %vm329
    %v331 = vsel %vm330, %v323, %v327
    %v332 = vand.u32 2147483647, %v322
    %vm333 = vcmp.eq.f32.partialorder %v332, 8.507059e+37
    %v334 = vand.u32 %v322, 2147483648
    %v335 = vor.u32 1.1754944e-38, %v334
    %v336 = vsel %vm333, %v335, %v331
    %v337 = vmul.f32 1.0, %v336
    %v338 = vsel %vm109, %v318, %v337
    %v340 = vrot.slane %v281, 6
    %v342 = vmul.f32 %v338, %v340
    %344 = vrot.lane.b32.xlu0 %v338, 64
    %v345 = vpop.permute.xlu0 %344
    %v347 = vmul.f32 %v338, %v345
    %349 = vrot.lane.b32.xlu0 %v347, 32
    %v350 = vpop.permute.xlu0 %349
    %v352 = vadd.f32 %v342, %v350
    %v353 = vtanh.pop %v352
    %355 = vrot.lane.b32.xlu0 %v353, 64
    %v356 = vpop.permute.xlu0 %355
    %v358 = vmul.f32 %v338, %v356
    %v360 = vrot.slane %v358, 4
    %361 = vrot.lane.b32.xlu0 %v360, 32
    %v362 = vpop.permute.xlu0 %361
    %v363 = vsel %vm155, %v362, 0
    %365 = vmatpush.msra.mxu0 0.0
    %366 = vmatpush.msra.mxu0 0.0
    %367 = vmatpush.msra.mxu0 0.0
    %368 = vmatpush.msra.mxu0 0.0
    %369 = vmatpush.msra.mxu0 0.0
    %370 = vmatpush.msra.mxu0 0.0
    %371 = vmatpush.msra.mxu0 0.0
    %372 = vmatpush.msra.mxu0 0.0
    %373 = vmatpush.msra.mxu0 0.0
    %374 = vmatpush.msra.mxu0 0.0
    %375 = vmatpush.msra.mxu0 0.0
    %376 = vmatpush.msra.mxu0 0.0
    %377 = vmatpush.msra.mxu0 %v154
    %378 = vmatpush.msra.mxu0 %v153
    %379 = vmatpush.msra.mxu0 %v152
    %380 = vmatpush.msra.mxu0 %v151
    %381 = vmatmul.f32.gmra.mxu0 %v363
    %v382 = vpop.f32.mrf.mxu0
    %v383 = vadd.f32 0.0, %v382
    %384 = vdwg.mxu0
    %v386 = vrot.slane %v383, 2
    %v388 = vadd.f32 %v146, %v386
    %v389 = vtanh.pop %v388
    %v390 = vxor.u32 %v388, 2147483648
    %v391 = vmul.f32 %v390, 1.442695
    %v392 = vpow.pop %v391
    %v393 = vadd.f32 %v392, 1.0
    %v394 = vrcp.pop %v393
    %v395 = vmul.f32 %v393, %v394
    %v396 = vsub.f32 1.0, %v395
    %v397 = vmul.f32 %v394, %v396
    %v398 = vadd.f32 %v394, %v397
    %vm399 = vweird.f32 %v393
    %vm400 = vweird.f32 %v394
    %vm401 = vmor %vm399, %vm400
    %v402 = vsel %vm401, %v394, %v398
    %v403 = vand.u32 2147483647, %v393
    %vm404 = vcmp.eq.f32.partialorder %v403, 8.507059e+37
    %v405 = vand.u32 %v393, 2147483648
    %v406 = vor.u32 1.1754944e-38, %v405
    %v407 = vsel %vm404, %v406, %v402
    %v408 = vmul.f32 1.0, %v407
    %v409 = vsel %vm109, %v389, %v408
    %v411 = vrot.slane %v352, 6
    %v413 = vmul.f32 %v409, %v411
    %415 = vrot.lane.b32.xlu0 %v409, 64
    %v416 = vpop.permute.xlu0 %415
    %v418 = vmul.f32 %v409, %v416
    %420 = vrot.lane.b32.xlu0 %v418, 32
    %v421 = vpop.permute.xlu0 %420
    %v423 = vadd.f32 %v413, %v421
    %v424 = vtanh.pop %v423
    %426 = vrot.lane.b32.xlu0 %v424, 64
    %v427 = vpop.permute.xlu0 %426
    %v429 = vmul.f32 %v409, %v427
    %v431 = vrot.slane %v429, 6
    %432 = vrot.lane.b32.xlu0 %v431, 32
    %v433 = vpop.permute.xlu0 %432
    %v434 = vsel %vm155, %v433, 0
    %436 = vmatpush.msra.mxu0 0.0
    %437 = vmatpush.msra.mxu0 0.0
    %438 = vmatpush.msra.mxu0 0.0
    %439 = vmatpush.msra.mxu0 0.0
    %440 = vmatpush.msra.mxu0 0.0
    %441 = vmatpush.msra.mxu0 0.0
    %442 = vmatpush.msra.mxu0 0.0
    %443 = vmatpush.msra.mxu0 0.0
    %444 = vmatpush.msra.mxu0 0.0
    %445 = vmatpush.msra.mxu0 0.0
    %446 = vmatpush.msra.mxu0 0.0
    %447 = vmatpush.msra.mxu0 0.0
    %448 = vmatpush.msra.mxu0 %v154
    %449 = vmatpush.msra.mxu0 %v153
    %450 = vmatpush.msra.mxu0 %v152
    %451 = vmatpush.msra.mxu0 %v151
    %452 = vmatmul.f32.gmra.mxu0 %v434
    %v453 = vpop.f32.mrf.mxu0
    %v454 = vadd.f32 0.0, %v453
    %455 = vdwg.mxu0
    %v456 = vadd.f32 %v149, %v454
    %v457 = vtanh.pop %v456
    %v458 = vxor.u32 %v456, 2147483648
    %v459 = vmul.f32 %v458, 1.442695
    %v460 = vpow.pop %v459
    %v461 = vadd.f32 %v460, 1.0
    %v462 = vrcp.pop %v461
    %v463 = vmul.f32 %v461, %v462
    %v464 = vsub.f32 1.0, %v463
    %v465 = vmul.f32 %v462, %v464
    %v466 = vadd.f32 %v462, %v465
    %vm467 = vweird.f32 %v461
    %vm468 = vweird.f32 %v462
    %vm469 = vmor %vm467, %vm468
    %v470 = vsel %vm469, %v462, %v466
    %v471 = vand.u32 2147483647, %v461
    %vm472 = vcmp.eq.f32.partialorder %v471, 8.507059e+37
    %v473 = vand.u32 %v461, 2147483648
    %v474 = vor.u32 1.1754944e-38, %v473
    %v475 = vsel %vm472, %v474, %v470
    %v476 = vmul.f32 1.0, %v475
    %v477 = vsel %vm109, %v457, %v476
    %v479 = vrot.slane %v423, 6
    %v481 = vmul.f32 %v477, %v479
    %483 = vrot.lane.b32.xlu0 %v477, 64
    %v484 = vpop.permute.xlu0 %483
    %v486 = vmul.f32 %v477, %v484
    %488 = vrot.lane.b32.xlu0 %v486, 32
    %v489 = vpop.permute.xlu0 %488
    %v491 = vadd.f32 %v481, %v489
    %v492 = vtanh.pop %v491
    %494 = vrot.lane.b32.xlu0 %v492, 64
    %v495 = vpop.permute.xlu0 %494
    %v497 = vmul.f32 %v477, %v495
    %499 = vrot.lane.b32.xlu0 %v497, 32
    %v500 = vpop.permute.xlu0 %499
    %v501 = vsel %vm155, %v500, 0
    %503 = vmatpush.msra.mxu0 0.0
    %504 = vmatpush.msra.mxu0 0.0
    %505 = vmatpush.msra.mxu0 0.0
    %506 = vmatpush.msra.mxu0 0.0
    %507 = vmatpush.msra.mxu0 0.0
    %508 = vmatpush.msra.mxu0 0.0
    %509 = vmatpush.msra.mxu0 0.0
    %510 = vmatpush.msra.mxu0 0.0
    %511 = vmatpush.msra.mxu0 0.0
    %512 = vmatpush.msra.mxu0 0.0
    %513 = vmatpush.msra.mxu0 0.0
    %514 = vmatpush.msra.mxu0 0.0
    %515 = vmatpush.msra.mxu0 %v154
    %516 = vmatpush.msra.mxu0 %v153
    %517 = vmatpush.msra.mxu0 %v152
    %518 = vmatpush.msra.mxu0 %v151
    %519 = vmatmul.f32.gmra.mxu0 %v501
    %v520 = vpop.f32.mrf.mxu0
    %v521 = vadd.f32 0.0, %v520
    %522 = vdwg.mxu0
    %v524 = vrot.slane %v521, 6
    %v526 = vadd.f32 %v149, %v524
    %v527 = vtanh.pop %v526
    %v528 = vxor.u32 %v526, 2147483648
    %v529 = vmul.f32 %v528, 1.442695
    %v530 = vpow.pop %v529
    %v531 = vadd.f32 %v530, 1.0
    %v532 = vrcp.pop %v531
    %v533 = vmul.f32 %v531, %v532
    %v534 = vsub.f32 1.0, %v533
    %v535 = vmul.f32 %v532, %v534
    %v536 = vadd.f32 %v532, %v535
    %vm537 = vweird.f32 %v531
    %vm538 = vweird.f32 %v532
    %vm539 = vmor %vm537, %vm538
    %v540 = vsel %vm539, %v532, %v536
    %v541 = vand.u32 2147483647, %v531
    %vm542 = vcmp.eq.f32.partialorder %v541, 8.507059e+37
    %v543 = vand.u32 %v531, 2147483648
    %v544 = vor.u32 1.1754944e-38, %v543
    %v545 = vsel %vm542, %v544, %v540
    %v546 = vmul.f32 1.0, %v545
    %v547 = vsel %vm109, %v527, %v546
    %v549 = vrot.slane %v491, 6
    %v551 = vmul.f32 %v547, %v549
    %553 = vrot.lane.b32.xlu0 %v547, 64
    %v554 = vpop.permute.xlu0 %553
    %v556 = vmul.f32 %v547, %v554
    %558 = vrot.lane.b32.xlu0 %v556, 32
    %v559 = vpop.permute.xlu0 %558
    %v561 = vadd.f32 %v551, %v559
    %v562 = vtanh.pop %v561
    %564 = vrot.lane.b32.xlu0 %v562, 64
    %v565 = vpop.permute.xlu0 %564
    %v567 = vmul.f32 %v547, %v565
    %v569 = vrot.slane %v567, 2
    %570 = vrot.lane.b32.xlu0 %v569, 32
    %v571 = vpop.permute.xlu0 %570
    %v572 = vsel %vm155, %v571, 0
    %574 = vmatpush.msra.mxu0 0.0
    %575 = vmatpush.msra.mxu0 0.0
    %576 = vmatpush.msra.mxu0 0.0
    %577 = vmatpush.msra.mxu0 0.0
    %578 = vmatpush.msra.mxu0 0.0
    %579 = vmatpush.msra.mxu0 0.0
    %580 = vmatpush.msra.mxu0 0.0
    %581 = vmatpush.msra.mxu0 0.0
    %582 = vmatpush.msra.mxu0 0.0
    %583 = vmatpush.msra.mxu0 0.0
    %584 = vmatpush.msra.mxu0 0.0
    %585 = vmatpush.msra.mxu0 0.0
    %586 = vmatpush.msra.mxu0 %v154
    %587 = vmatpush.msra.mxu0 %v153
    %588 = vmatpush.msra.mxu0 %v152
    %589 = vmatpush.msra.mxu0 %v151
    %590 = vmatmul.f32.gmra.mxu0 %v572
    %v591 = vpop.f32.mrf.mxu0
    %v592 = vadd.f32 0.0, %v591
    %593 = vdwg.mxu0
    %v595 = vrot.slane %v592, 4
    %v597 = vadd.f32 %v149, %v595
    %v598 = vtanh.pop %v597
    %v599 = vxor.u32 %v597, 2147483648
    %v600 = vmul.f32 %v599, 1.442695
    %v601 = vpow.pop %v600
    %v602 = vadd.f32 %v601, 1.0
    %v603 = vrcp.pop %v602
    %v604 = vmul.f32 %v602, %v603
    %v605 = vsub.f32 1.0, %v604
    %v606 = vmul.f32 %v603, %v605
    %v607 = vadd.f32 %v603, %v606
    %vm608 = vweird.f32 %v602
    %vm609 = vweird.f32 %v603
    %vm610 = vmor %vm608, %vm609
    %v611 = vsel %vm610, %v603, %v607
    %v612 = vand.u32 2147483647, %v602
    %vm613 = vcmp.eq.f32.partialorder %v612, 8.507059e+37
    %v614 = vand.u32 %v602, 2147483648
    %v615 = vor.u32 1.1754944e-38, %v614
    %v616 = vsel %vm613, %v615, %v611
    %v617 = vmul.f32 1.0, %v616
    %v618 = vsel %vm109, %v598, %v617
    %v620 = vrot.slane %v561, 6
    %v622 = vmul.f32 %v618, %v620
    %624 = vrot.lane.b32.xlu0 %v618, 64
    %v625 = vpop.permute.xlu0 %624
    %v627 = vmul.f32 %v618, %v625
    %629 = vrot.lane.b32.xlu0 %v627, 32
    %v630 = vpop.permute.xlu0 %629
    %v632 = vadd.f32 %v622, %v630
    %v633 = vtanh.pop %v632
    %635 = vrot.lane.b32.xlu0 %v633, 64
    %v636 = vpop.permute.xlu0 %635
    %v638 = vmul.f32 %v618, %v636
    %v640 = vrot.slane %v638, 4
    %641 = vrot.lane.b32.xlu0 %v640, 32
    %v642 = vpop.permute.xlu0 %641
    %v643 = vsel %vm155, %v642, 0
    %645 = vmatpush.msra.mxu0 0.0
    %646 = vmatpush.msra.mxu0 0.0
    %647 = vmatpush.msra.mxu0 0.0
    %648 = vmatpush.msra.mxu0 0.0
    %649 = vmatpush.msra.mxu0 0.0
    %650 = vmatpush.msra.mxu0 0.0
    %651 = vmatpush.msra.mxu0 0.0
    %652 = vmatpush.msra.mxu0 0.0
    %653 = vmatpush.msra.mxu0 0.0
    %654 = vmatpush.msra.mxu0 0.0
    %655 = vmatpush.msra.mxu0 0.0
    %656 = vmatpush.msra.mxu0 0.0
    %657 = vmatpush.msra.mxu0 %v154
    %658 = vmatpush.msra.mxu0 %v153
    %659 = vmatpush.msra.mxu0 %v152
    %660 = vmatpush.msra.mxu0 %v151
    %661 = vmatmul.f32.gmra.mxu0 %v643
    %v662 = vpop.f32.mrf.mxu0
    %v663 = vadd.f32 0.0, %v662
    %664 = vdwg.mxu0
    %v666 = vrot.slane %v663, 2
    %v668 = vadd.f32 %v149, %v666
    %v669 = vtanh.pop %v668
    %v670 = vxor.u32 %v668, 2147483648
    %v671 = vmul.f32 %v670, 1.442695
    %v672 = vpow.pop %v671
    %v673 = vadd.f32 %v672, 1.0
    %v674 = vrcp.pop %v673
    %v675 = vmul.f32 %v673, %v674
    %v676 = vsub.f32 1.0, %v675
    %v677 = vmul.f32 %v674, %v676
    %v678 = vadd.f32 %v674, %v677
    %vm679 = vweird.f32 %v673
    %vm680 = vweird.f32 %v674
    %vm681 = vmor %vm679, %vm680
    %v682 = vsel %vm681, %v674, %v678
    %v683 = vand.u32 2147483647, %v673
    %vm684 = vcmp.eq.f32.partialorder %v683, 8.507059e+37
    %v685 = vand.u32 %v673, 2147483648
    %v686 = vor.u32 1.1754944e-38, %v685
    %v687 = vsel %vm684, %v686, %v682
    %v688 = vmul.f32 1.0, %v687
    %v689 = vsel %vm109, %v669, %v688
    %v691 = vrot.slane %v632, 6
    %v693 = vmul.f32 %v689, %v691
    %695 = vrot.lane.b32.xlu0 %v689, 64
    %v696 = vpop.permute.xlu0 %695
    %v698 = vmul.f32 %v689, %v696
    %700 = vrot.lane.b32.xlu0 %v698, 32
    %v701 = vpop.permute.xlu0 %700
    %v703 = vadd.f32 %v693, %v701
    %v704 = vtanh.pop %v703
    %706 = vrot.lane.b32.xlu0 %v704, 64
    %v707 = vpop.permute.xlu0 %706
    %v709 = vmul.f32 %v689, %v707
    %711 = vrot.lane.b32.xlu0 %v703, 96
    %v712 = vpop.permute.xlu0 %711
    %vm714 = vcmask 261126
    %715 = vst.msk [vmem:[#allocation14 - $0x6] sm:$0xc0] %vm714, %v712
    %vm716 = vcmask 1041408
    %v717 = vsel %vm716, %v217, %v287
    %v718 = vsel %vm124, %v717, %v358
    %vm719 = vcmask 1045504
    %v720 = vsel %vm719, %v718, %v429
    %v721 = vsel %vm716, %v497, %v567
    %v722 = vsel %vm124, %v721, %v638
    %v723 = vsel %vm719, %v722, %v709
    %v724 = vld [vmem:[#allocation2] sm:$0xff]
    %v725 = vld [vmem:[#allocation2 + $0x8] sm:$0xff]
    %v726 = vld [vmem:[#allocation2 + $0x10] sm:$0xff]
    %v727 = vld [vmem:[#allocation2 + $0x18] sm:$0xff]
    %v728 = vld [vmem:[%s6] sm:$0x1]
    %v730 = vperm.slane %v728, 0
    %734 = vrot.lane.b32.xlu0 %v720, 32
    %v735 = vpop.permute.xlu0 %734
    %736 = vrot.lane.b32.xlu0 %v723, 32
    %v737 = vpop.permute.xlu0 %736
    %v738 = vsel %vm155, %v735, 0
    %v740 = vsel %vm155, %v737, 0
    %742 = vmatpush.msra.mxu0 0.0
    %743 = vmatpush.msra.mxu0 0.0
    %744 = vmatpush.msra.mxu0 0.0
    %745 = vmatpush.msra.mxu0 0.0
    %746 = vmatpush.msra.mxu0 0.0
    %747 = vmatpush.msra.mxu0 0.0
    %748 = vmatpush.msra.mxu0 0.0
    %749 = vmatpush.msra.mxu0 0.0
    %750 = vmatpush.msra.mxu0 0.0
    %751 = vmatpush.msra.mxu0 0.0
    %752 = vmatpush.msra.mxu0 0.0
    %753 = vmatpush.msra.mxu0 0.0
    %754 = vmatpush.msra.mxu0 %v727
    %755 = vmatpush.msra.mxu0 %v726
    %756 = vmatpush.msra.mxu0 %v725
    %757 = vmatpush.msra.mxu0 %v724
    %758 = vmatmul.f32.gmra.mxu0 %v738
    %v759 = vpop.f32.mrf.mxu0
    %v760 = vadd.f32 %v730, %v759
    %761 = vmatmul.f32.gmra.mxu0 %v740
    %v762 = vpop.f32.mrf.mxu0
    %v763 = vadd.f32 %v730, %v762
    %764 = vdwg.mxu0
    %v765 = vld [vmem:[#allocation7] sm:$0xff]
    %v766 = vld [vmem:[#allocation7 + $0x8] sm:$0xff]
    %v767 = vld [vmem:[#allocation7 + $0x10] sm:$0xff]
    %v768 = vld [vmem:[#allocation7 + $0x18] sm:$0xff]
    %769 = vmatpush.msra.mxu0 0.0
    %770 = vmatpush.msra.mxu0 0.0
    %771 = vmatpush.msra.mxu0 0.0
    %772 = vmatpush.msra.mxu0 0.0
    %773 = vmatpush.msra.mxu0 0.0
    %774 = vmatpush.msra.mxu0 0.0
    %775 = vmatpush.msra.mxu0 0.0
    %776 = vmatpush.msra.mxu0 0.0
    %777 = vmatpush.msra.mxu0 0.0
    %778 = vmatpush.msra.mxu0 0.0
    %779 = vmatpush.msra.mxu0 0.0
    %780 = vmatpush.msra.mxu0 0.0
    %781 = vmatpush.msra.mxu0 %v768
    %782 = vmatpush.msra.mxu0 %v767
    %783 = vmatpush.msra.mxu0 %v766
    %784 = vmatpush.msra.mxu0 %v765
    %785 = vmatmul.f32.gmra.mxu0 %v157
    %v786 = vpop.f32.mrf.mxu0
    %v787 = vadd.f32 0.0, %v786
    %788 = vdwg.mxu0
    %v789 = vadd.f32 %v760, %v787
    %v790 = vtanh.pop %v789
    %v791 = vxor.u32 %v789, 2147483648
    %v792 = vmul.f32 %v791, 1.442695
    %v793 = vpow.pop %v792
    %v794 = vadd.f32 %v793, 1.0
    %v795 = vrcp.pop %v794
    %v796 = vmul.f32 %v794, %v795
    %v797 = vsub.f32 1.0, %v796
    %v798 = vmul.f32 %v795, %v797
    %v799 = vadd.f32 %v795, %v798
    %vm800 = vweird.f32 %v794
    %vm801 = vweird.f32 %v795
    %vm802 = vmor %vm800, %vm801
    %v803 = vsel %vm802, %v795, %v799
    %v804 = vand.u32 2147483647, %v794
    %vm805 = vcmp.eq.f32.partialorder %v804, 8.507059e+37
    %v806 = vand.u32 %v794, 2147483648
    %v807 = vor.u32 1.1754944e-38, %v806
    %v808 = vsel %vm805, %v807, %v803
    %v809 = vmul.f32 1.0, %v808
    %v810 = vsel %vm109, %v790, %v809
    %v811 = vmul.f32 %v810, 0.0
    %813 = vrot.lane.b32.xlu0 %v810, 64
    %v814 = vpop.permute.xlu0 %813
    %v816 = vmul.f32 %v810, %v814
    %818 = vrot.lane.b32.xlu0 %v816, 32
    %v819 = vpop.permute.xlu0 %818
    %v821 = vadd.f32 %v811, %v819
    %v822 = vtanh.pop %v821
    %824 = vrot.lane.b32.xlu0 %v822, 64
    %v825 = vpop.permute.xlu0 %824
    %v827 = vmul.f32 %v810, %v825
    %829 = vrot.lane.b32.xlu0 %v827, 32
    %v830 = vpop.permute.xlu0 %829
    %v831 = vsel %vm155, %v830, 0
    %833 = vmatpush.msra.mxu0 0.0
    %834 = vmatpush.msra.mxu0 0.0
    %835 = vmatpush.msra.mxu0 0.0
    %836 = vmatpush.msra.mxu0 0.0
    %837 = vmatpush.msra.mxu0 0.0
    %838 = vmatpush.msra.mxu0 0.0
    %839 = vmatpush.msra.mxu0 0.0
    %840 = vmatpush.msra.mxu0 0.0
    %841 = vmatpush.msra.mxu0 0.0
    %842 = vmatpush.msra.mxu0 0.0
    %843 = vmatpush.msra.mxu0 0.0
    %844 = vmatpush.msra.mxu0 0.0
    %845 = vmatpush.msra.mxu0 %v768
    %846 = vmatpush.msra.mxu0 %v767
    %847 = vmatpush.msra.mxu0 %v766
    %848 = vmatpush.msra.mxu0 %v765
    %849 = vmatmul.f32.gmra.mxu0 %v831
    %v850 = vpop.f32.mrf.mxu0
    %v851 = vadd.f32 0.0, %v850
    %852 = vdwg.mxu0
    %v854 = vrot.slane %v851, 6
    %v856 = vadd.f32 %v760, %v854
    %v857 = vtanh.pop %v856
    %v858 = vxor.u32 %v856, 2147483648
    %v859 = vmul.f32 %v858, 1.442695
    %v860 = vpow.pop %v859
    %v861 = vadd.f32 %v860, 1.0
    %v862 = vrcp.pop %v861
    %v863 = vmul.f32 %v861, %v862
    %v864 = vsub.f32 1.0, %v863
    %v865 = vmul.f32 %v862, %v864
    %v866 = vadd.f32 %v862, %v865
    %vm867 = vweird.f32 %v861
    %vm868 = vweird.f32 %v862
    %vm869 = vmor %vm867, %vm868
    %v870 = vsel %vm869, %v862, %v866
    %v871 = vand.u32 2147483647, %v861
    %vm872 = vcmp.eq.f32.partialorder %v871, 8.507059e+37
    %v873 = vand.u32 %v861, 2147483648
    %v874 = vor.u32 1.1754944e-38, %v873
    %v875 = vsel %vm872, %v874, %v870
    %v876 = vmul.f32 1.0, %v875
    %v877 = vsel %vm109, %v857, %v876
    %v879 = vrot.slane %v821, 6
    %v881 = vmul.f32 %v877, %v879
    %883 = vrot.lane.b32.xlu0 %v877, 64
    %v884 = vpop.permute.xlu0 %883
    %v886 = vmul.f32 %v877, %v884
    %888 = vrot.lane.b32.xlu0 %v886, 32
    %v889 = vpop.permute.xlu0 %888
    %v891 = vadd.f32 %v881, %v889
    %v892 = vtanh.pop %v891
    %894 = vrot.lane.b32.xlu0 %v892, 64
    %v895 = vpop.permute.xlu0 %894
    %v897 = vmul.f32 %v877, %v895
    %v899 = vrot.slane %v897, 2
    %900 = vrot.lane.b32.xlu0 %v899, 32
    %v901 = vpop.permute.xlu0 %900
    %v902 = vsel %vm155, %v901, 0
    %904 = vmatpush.msra.mxu0 0.0
    %905 = vmatpush.msra.mxu0 0.0
    %906 = vmatpush.msra.mxu0 0.0
    %907 = vmatpush.msra.mxu0 0.0
    %908 = vmatpush.msra.mxu0 0.0
    %909 = vmatpush.msra.mxu0 0.0
    %910 = vmatpush.msra.mxu0 0.0
    %911 = vmatpush.msra.mxu0 0.0
    %912 = vmatpush.msra.mxu0 0.0
    %913 = vmatpush.msra.mxu0 0.0
    %914 = vmatpush.msra.mxu0 0.0
    %915 = vmatpush.msra.mxu0 0.0
    %916 = vmatpush.msra.mxu0 %v768
    %917 = vmatpush.msra.mxu0 %v767
    %918 = vmatpush.msra.mxu0 %v766
    %919 = vmatpush.msra.mxu0 %v765
    %920 = vmatmul.f32.gmra.mxu0 %v902
    %v921 = vpop.f32.mrf.mxu0
    %v922 = vadd.f32 0.0, %v921
    %923 = vdwg.mxu0
    %v925 = vrot.slane %v922, 4
    %v927 = vadd.f32 %v760, %v925
    %v928 = vtanh.pop %v927
    %v929 = vxor.u32 %v927, 2147483648
    %v930 = vmul.f32 %v929, 1.442695
    %v931 = vpow.pop %v930
    %v932 = vadd.f32 %v931, 1.0
    %v933 = vrcp.pop %v932
    %v934 = vmul.f32 %v932, %v933
    %v935 = vsub.f32 1.0, %v934
    %v936 = vmul.f32 %v933, %v935
    %v937 = vadd.f32 %v933, %v936
    %vm938 = vweird.f32 %v932
    %vm939 = vweird.f32 %v933
    %vm940 = vmor %vm938, %vm939
    %v941 = vsel %vm940, %v933, %v937
    %v942 = vand.u32 2147483647, %v932
    %vm943 = vcmp.eq.f32.partialorder %v942, 8.507059e+37
    %v944 = vand.u32 %v932, 2147483648
    %v945 = vor.u32 1.1754944e-38, %v944
    %v946 = vsel %vm943, %v945, %v941
    %v947 = vmul.f32 1.0, %v946
    %v948 = vsel %vm109, %v928, %v947
    %v950 = vrot.slane %v891, 6
    %v952 = vmul.f32 %v948, %v950
    %954 = vrot.lane.b32.xlu0 %v948, 64
    %v955 = vpop.permute.xlu0 %954
    %v957 = vmul.f32 %v948, %v955
    %959 = vrot.lane.b32.xlu0 %v957, 32
    %v960 = vpop.permute.xlu0 %959
    %v962 = vadd.f32 %v952, %v960
    %v963 = vtanh.pop %v962
    %965 = vrot.lane.b32.xlu0 %v963, 64
    %v966 = vpop.permute.xlu0 %965
    %v968 = vmul.f32 %v948, %v966
    %v970 = vrot.slane %v968, 4
    %971 = vrot.lane.b32.xlu0 %v970, 32
    %v972 = vpop.permute.xlu0 %971
    %v973 = vsel %vm155, %v972, 0
    %975 = vmatpush.msra.mxu0 0.0
    %976 = vmatpush.msra.mxu0 0.0
    %977 = vmatpush.msra.mxu0 0.0
    %978 = vmatpush.msra.mxu0 0.0
    %979 = vmatpush.msra.mxu0 0.0
    %980 = vmatpush.msra.mxu0 0.0
    %981 = vmatpush.msra.mxu0 0.0
    %982 = vmatpush.msra.mxu0 0.0
    %983 = vmatpush.msra.mxu0 0.0
    %984 = vmatpush.msra.mxu0 0.0
    %985 = vmatpush.msra.mxu0 0.0
    %986 = vmatpush.msra.mxu0 0.0
    %987 = vmatpush.msra.mxu0 %v768
    %988 = vmatpush.msra.mxu0 %v767
    %989 = vmatpush.msra.mxu0 %v766
    %990 = vmatpush.msra.mxu0 %v765
    %991 = vmatmul.f32.gmra.mxu0 %v973
    %v992 = vpop.f32.mrf.mxu0
    %v993 = vadd.f32 0.0, %v992
    %994 = vdwg.mxu0
    %v996 = vrot.slane %v993, 2
    %v998 = vadd.f32 %v760, %v996
    %v999 = vtanh.pop %v998
    %v1000 = vxor.u32 %v998, 2147483648
    %v1001 = vmul.f32 %v1000, 1.442695
    %v1002 = vpow.pop %v1001
    %v1003 = vadd.f32 %v1002, 1.0
    %v1004 = vrcp.pop %v1003
    %v1005 = vmul.f32 %v1003, %v1004
    %v1006 = vsub.f32 1.0, %v1005
    %v1007 = vmul.f32 %v1004, %v1006
    %v1008 = vadd.f32 %v1004, %v1007
    %vm1009 = vweird.f32 %v1003
    %vm1010 = vweird.f32 %v1004
    %vm1011 = vmor %vm1009, %vm1010
    %v1012 = vsel %vm1011, %v1004, %v1008
    %v1013 = vand.u32 2147483647, %v1003
    %vm1014 = vcmp.eq.f32.partialorder %v1013, 8.507059e+37
    %v1015 = vand.u32 %v1003, 2147483648
    %v1016 = vor.u32 1.1754944e-38, %v1015
    %v1017 = vsel %vm1014, %v1016, %v1012
    %v1018 = vmul.f32 1.0, %v1017
    %v1019 = vsel %vm109, %v999, %v1018
    %v1021 = vrot.slane %v962, 6
    %v1023 = vmul.f32 %v1019, %v1021
    %1025 = vrot.lane.b32.xlu0 %v1019, 64
    %v1026 = vpop.permute.xlu0 %1025
    %v1028 = vmul.f32 %v1019, %v1026
    %1030 = vrot.lane.b32.xlu0 %v1028, 32
    %v1031 = vpop.permute.xlu0 %1030
    %v1033 = vadd.f32 %v1023, %v1031
    %v1034 = vtanh.pop %v1033
    %1036 = vrot.lane.b32.xlu0 %v1034, 64
    %v1037 = vpop.permute.xlu0 %1036
    %v1039 = vmul.f32 %v1019, %v1037
    %v1041 = vrot.slane %v1039, 6
    %1042 = vrot.lane.b32.xlu0 %v1041, 32
    %v1043 = vpop.permute.xlu0 %1042
    %v1044 = vsel %vm155, %v1043, 0
    %1046 = vmatpush.msra.mxu0 0.0
    %1047 = vmatpush.msra.mxu0 0.0
    %1048 = vmatpush.msra.mxu0 0.0
    %1049 = vmatpush.msra.mxu0 0.0
    %1050 = vmatpush.msra.mxu0 0.0
    %1051 = vmatpush.msra.mxu0 0.0
    %1052 = vmatpush.msra.mxu0 0.0
    %1053 = vmatpush.msra.mxu0 0.0
    %1054 = vmatpush.msra.mxu0 0.0
    %1055 = vmatpush.msra.mxu0 0.0
    %1056 = vmatpush.msra.mxu0 0.0
    %1057 = vmatpush.msra.mxu0 0.0
    %1058 = vmatpush.msra.mxu0 %v768
    %1059 = vmatpush.msra.mxu0 %v767
    %1060 = vmatpush.msra.mxu0 %v766
    %1061 = vmatpush.msra.mxu0 %v765
    %1062 = vmatmul.f32.gmra.mxu0 %v1044
    %v1063 = vpop.f32.mrf.mxu0
    %v1064 = vadd.f32 0.0, %v1063
    %1065 = vdwg.mxu0
    %v1066 = vadd.f32 %v763, %v1064
    %v1067 = vtanh.pop %v1066
    %v1068 = vxor.u32 %v1066, 2147483648
    %v1069 = vmul.f32 %v1068, 1.442695
    %v1070 = vpow.pop %v1069
    %v1071 = vadd.f32 %v1070, 1.0
    %v1072 = vrcp.pop %v1071
    %v1073 = vmul.f32 %v1071, %v1072
    %v1074 = vsub.f32 1.0, %v1073
    %v1075 = vmul.f32 %v1072, %v1074
    %v1076 = vadd.f32 %v1072, %v1075
    %vm1077 = vweird.f32 %v1071
    %vm1078 = vweird.f32 %v1072
    %vm1079 = vmor %vm1077, %vm1078
    %v1080 = vsel %vm1079, %v1072, %v1076
    %v1081 = vand.u32 2147483647, %v1071
    %vm1082 = vcmp.eq.f32.partialorder %v1081, 8.507059e+37
    %v1083 = vand.u32 %v1071, 2147483648
    %v1084 = vor.u32 1.1754944e-38, %v1083
    %v1085 = vsel %vm1082, %v1084, %v1080
    %v1086 = vmul.f32 1.0, %v1085
    %v1087 = vsel %vm109, %v1067, %v1086
    %v1089 = vrot.slane %v1033, 6
    %v1091 = vmul.f32 %v1087, %v1089
    %1093 = vrot.lane.b32.xlu0 %v1087, 64
    %v1094 = vpop.permute.xlu0 %1093
    %v1096 = vmul.f32 %v1087, %v1094
    %1098 = vrot.lane.b32.xlu0 %v1096, 32
    %v1099 = vpop.permute.xlu0 %1098
    %v1101 = vadd.f32 %v1091, %v1099
    %v1102 = vtanh.pop %v1101
    %1104 = vrot.lane.b32.xlu0 %v1102, 64
    %v1105 = vpop.permute.xlu0 %1104
    %v1107 = vmul.f32 %v1087, %v1105
    %1109 = vrot.lane.b32.xlu0 %v1107, 32
    %v1110 = vpop.permute.xlu0 %1109
    %v1111 = vsel %vm155, %v1110, 0
    %1113 = vmatpush.msra.mxu0 0.0
    %1114 = vmatpush.msra.mxu0 0.0
    %1115 = vmatpush.msra.mxu0 0.0
    %1116 = vmatpush.msra.mxu0 0.0
    %1117 = vmatpush.msra.mxu0 0.0
    %1118 = vmatpush.msra.mxu0 0.0
    %1119 = vmatpush.msra.mxu0 0.0
    %1120 = vmatpush.msra.mxu0 0.0
    %1121 = vmatpush.msra.mxu0 0.0
    %1122 = vmatpush.msra.mxu0 0.0
    %1123 = vmatpush.msra.mxu0 0.0
    %1124 = vmatpush.msra.mxu0 0.0
    %1125 = vmatpush.msra.mxu0 %v768
    %1126 = vmatpush.msra.mxu0 %v767
    %1127 = vmatpush.msra.mxu0 %v766
    %1128 = vmatpush.msra.mxu0 %v765
    %1129 = vmatmul.f32.gmra.mxu0 %v1111
    %v1130 = vpop.f32.mrf.mxu0
    %v1131 = vadd.f32 0.0, %v1130
    %1132 = vdwg.mxu0
    %v1134 = vrot.slane %v1131, 6
    %v1136 = vadd.f32 %v763, %v1134
    %v1137 = vtanh.pop %v1136
    %v1138 = vxor.u32 %v1136, 2147483648
    %v1139 = vmul.f32 %v1138, 1.442695
    %v1140 = vpow.pop %v1139
    %v1141 = vadd.f32 %v1140, 1.0
    %v1142 = vrcp.pop %v1141
    %v1143 = vmul.f32 %v1141, %v1142
    %v1144 = vsub.f32 1.0, %v1143
    %v1145 = vmul.f32 %v1142, %v1144
    %v1146 = vadd.f32 %v1142, %v1145
    %vm1147 = vweird.f32 %v1141
    %vm1148 = vweird.f32 %v1142
    %vm1149 = vmor %vm1147, %vm1148
    %v1150 = vsel %vm1149, %v1142, %v1146
    %v1151 = vand.u32 2147483647, %v1141
    %vm1152 = vcmp.eq.f32.partialorder %v1151, 8.507059e+37
    %v1153 = vand.u32 %v1141, 2147483648
    %v1154 = vor.u32 1.1754944e-38, %v1153
    %v1155 = vsel %vm1152, %v1154, %v1150
    %v1156 = vmul.f32 1.0, %v1155
    %v1157 = vsel %vm109, %v1137, %v1156
    %v1159 = vrot.slane %v1101, 6
    %v1161 = vmul.f32 %v1157, %v1159
    %1163 = vrot.lane.b32.xlu0 %v1157, 64
    %v1164 = vpop.permute.xlu0 %1163
    %v1166 = vmul.f32 %v1157, %v1164
    %1168 = vrot.lane.b32.xlu0 %v1166, 32
    %v1169 = vpop.permute.xlu0 %1168
    %v1171 = vadd.f32 %v1161, %v1169
    %v1172 = vtanh.pop %v1171
    %1174 = vrot.lane.b32.xlu0 %v1172, 64
    %v1175 = vpop.permute.xlu0 %1174
    %v1177 = vmul.f32 %v1157, %v1175
    %v1179 = vrot.slane %v1177, 2
    %1180 = vrot.lane.b32.xlu0 %v1179, 32
    %v1181 = vpop.permute.xlu0 %1180
    %v1182 = vsel %vm155, %v1181, 0
    %1184 = vmatpush.msra.mxu0 0.0
    %1185 = vmatpush.msra.mxu0 0.0
    %1186 = vmatpush.msra.mxu0 0.0
    %1187 = vmatpush.msra.mxu0 0.0
    %1188 = vmatpush.msra.mxu0 0.0
    %1189 = vmatpush.msra.mxu0 0.0
    %1190 = vmatpush.msra.mxu0 0.0
    %1191 = vmatpush.msra.mxu0 0.0
    %1192 = vmatpush.msra.mxu0 0.0
    %1193 = vmatpush.msra.mxu0 0.0
    %1194 = vmatpush.msra.mxu0 0.0
    %1195 = vmatpush.msra.mxu0 0.0
    %1196 = vmatpush.msra.mxu0 %v768
    %1197 = vmatpush.msra.mxu0 %v767
    %1198 = vmatpush.msra.mxu0 %v766
    %1199 = vmatpush.msra.mxu0 %v765
    %1200 = vmatmul.f32.gmra.mxu0 %v1182
    %v1201 = vpop.f32.mrf.mxu0
    %v1202 = vadd.f32 0.0, %v1201
    %1203 = vdwg.mxu0
    %v1205 = vrot.slane %v1202, 4
    %v1207 = vadd.f32 %v763, %v1205
    %v1208 = vtanh.pop %v1207
    %v1209 = vxor.u32 %v1207, 2147483648
    %v1210 = vmul.f32 %v1209, 1.442695
    %v1211 = vpow.pop %v1210
    %v1212 = vadd.f32 %v1211, 1.0
    %v1213 = vrcp.pop %v1212
    %v1214 = vmul.f32 %v1212, %v1213
    %v1215 = vsub.f32 1.0, %v1214
    %v1216 = vmul.f32 %v1213, %v1215
    %v1217 = vadd.f32 %v1213, %v1216
    %vm1218 = vweird.f32 %v1212
    %vm1219 = vweird.f32 %v1213
    %vm1220 = vmor %vm1218, %vm1219
    %v1221 = vsel %vm1220, %v1213, %v1217
    %v1222 = vand.u32 2147483647, %v1212
    %vm1223 = vcmp.eq.f32.partialorder %v1222, 8.507059e+37
    %v1224 = vand.u32 %v1212, 2147483648
    %v1225 = vor.u32 1.1754944e-38, %v1224
    %v1226 = vsel %vm1223, %v1225, %v1221
    %v1227 = vmul.f32 1.0, %v1226
    %v1228 = vsel %vm109, %v1208, %v1227
    %v1230 = vrot.slane %v1171, 6
    %v1232 = vmul.f32 %v1228, %v1230
    %1234 = vrot.lane.b32.xlu0 %v1228, 64
    %v1235 = vpop.permute.xlu0 %1234
    %v1237 = vmul.f32 %v1228, %v1235
    %1239 = vrot.lane.b32.xlu0 %v1237, 32
    %v1240 = vpop.permute.xlu0 %1239
    %v1242 = vadd.f32 %v1232, %v1240
    %v1243 = vtanh.pop %v1242
    %1245 = vrot.lane.b32.xlu0 %v1243, 64
    %v1246 = vpop.permute.xlu0 %1245
    %v1248 = vmul.f32 %v1228, %v1246
    %v1250 = vrot.slane %v1248, 4
    %1251 = vrot.lane.b32.xlu0 %v1250, 32
    %v1252 = vpop.permute.xlu0 %1251
    %v1253 = vsel %vm155, %v1252, 0
    %1255 = vmatpush.msra.mxu0 0.0
    %1256 = vmatpush.msra.mxu0 0.0
    %1257 = vmatpush.msra.mxu0 0.0
    %1258 = vmatpush.msra.mxu0 0.0
    %1259 = vmatpush.msra.mxu0 0.0
    %1260 = vmatpush.msra.mxu0 0.0
    %1261 = vmatpush.msra.mxu0 0.0
    %1262 = vmatpush.msra.mxu0 0.0
    %1263 = vmatpush.msra.mxu0 0.0
    %1264 = vmatpush.msra.mxu0 0.0
    %1265 = vmatpush.msra.mxu0 0.0
    %1266 = vmatpush.msra.mxu0 0.0
    %1267 = vmatpush.msra.mxu0 %v768
    %1268 = vmatpush.msra.mxu0 %v767
    %1269 = vmatpush.msra.mxu0 %v766
    %1270 = vmatpush.msra.mxu0 %v765
    %1271 = vmatmul.f32.gmra.mxu0 %v1253
    %v1272 = vpop.f32.mrf.mxu0
    %v1273 = vadd.f32 0.0, %v1272
    %1274 = vdwg.mxu0
    %v1276 = vrot.slane %v1273, 2
    %v1278 = vadd.f32 %v763, %v1276
    %v1279 = vtanh.pop %v1278
    %v1280 = vxor.u32 %v1278, 2147483648
    %v1281 = vmul.f32 %v1280, 1.442695
    %v1282 = vpow.pop %v1281
    %v1283 = vadd.f32 %v1282, 1.0
    %v1284 = vrcp.pop %v1283
    %v1285 = vmul.f32 %v1283, %v1284
    %v1286 = vsub.f32 1.0, %v1285
    %v1287 = vmul.f32 %v1284, %v1286
    %v1288 = vadd.f32 %v1284, %v1287
    %vm1289 = vweird.f32 %v1283
    %vm1290 = vweird.f32 %v1284
    %vm1291 = vmor %vm1289, %vm1290
    %v1292 = vsel %vm1291, %v1284, %v1288
    %v1293 = vand.u32 2147483647, %v1283
    %vm1294 = vcmp.eq.f32.partialorder %v1293, 8.507059e+37
    %v1295 = vand.u32 %v1283, 2147483648
    %v1296 = vor.u32 1.1754944e-38, %v1295
    %v1297 = vsel %vm1294, %v1296, %v1292
    %v1298 = vmul.f32 1.0, %v1297
    %v1299 = vsel %vm109, %v1279, %v1298
    %v1301 = vrot.slane %v1242, 6
    %v1303 = vmul.f32 %v1299, %v1301
    %1305 = vrot.lane.b32.xlu0 %v1299, 64
    %v1306 = vpop.permute.xlu0 %1305
    %v1308 = vmul.f32 %v1299, %v1306
    %1310 = vrot.lane.b32.xlu0 %v1308, 32
    %v1311 = vpop.permute.xlu0 %1310
    %v1313 = vadd.f32 %v1303, %v1311
    %v1314 = vtanh.pop %v1313
    %1316 = vrot.lane.b32.xlu0 %v1314, 64
    %v1317 = vpop.permute.xlu0 %1316
    %v1319 = vmul.f32 %v1299, %v1317
    %1321 = vrot.lane.b32.xlu0 %v1313, 96
    %v1322 = vpop.permute.xlu0 %1321
    %s1324 = scalar_lea.vmem [#allocation14], 2
    %1325 = vst.msk [vmem:[%s1324 - $0x6] sm:$0xc0] %vm714, %v1322
    %1327 = vrot.lane.b32.xlu0 %v709, 32
    %v1328 = vpop.permute.xlu0 %1327
    %v1330 = vrot.slane %v709, 1
    %1331 = vrot.lane.b32.xlu0 %v1330, 64
    %v1332 = vpop.permute.xlu0 %1331
    %v1334 = vsel %vm155, %v1328, %v1332
    %1336 = vrot.lane.b32.xlu0 %v1319, 32
    %v1337 = vpop.permute.xlu0 %1336
    %v1339 = vrot.slane %v1319, 1
    %1340 = vrot.lane.b32.xlu0 %v1339, 64
    %v1341 = vpop.permute.xlu0 %1340
    %v1343 = vsel %vm155, %v1337, %v1341
    %v1345 = vrot.slane %v1334, 6
    %v1348 = vrot.slane %v1343, 5
    %vm1350 = vcmask 1040384
    %v1351 = vsel %vm1350, %v1345, %v1348
    %v1352 = vld [vmem:[#allocation8] sm:$0xff]
    %v1353 = vld [vmem:[#allocation8 + $0x8] sm:$0xff]
    %v1354 = vld [vmem:[#allocation8 + $0x10] sm:$0xff]
    %v1355 = vld [vmem:[#allocation8 + $0x18] sm:$0xff]
    %v1356 = vld [vmem:[#allocation8 + $0x20] sm:$0xff]
    %v1357 = vld [vmem:[#allocation8 + $0x28] sm:$0xff]
    %v1358 = vld [vmem:[#allocation8 + $0x30] sm:$0xff]
    %v1359 = vld [vmem:[#allocation8 + $0x38] sm:$0xff]
    %v1360 = vld [vmem:[%s8] sm:$0x1]
    %v1362 = vperm.slane %v1360, 0
    %vm1364 = vcmask 523264
    %v1366 = vsel %vm1364, %v1351, 0
    %1368 = vmatpush.msra.mxu0 0.0
    %1369 = vmatpush.msra.mxu0 0.0
    %1370 = vmatpush.msra.mxu0 0.0
    %1371 = vmatpush.msra.mxu0 0.0
    %1372 = vmatpush.msra.mxu0 0.0
    %1373 = vmatpush.msra.mxu0 0.0
    %1374 = vmatpush.msra.mxu0 0.0
    %1375 = vmatpush.msra.mxu0 0.0
    %1376 = vmatpush.msra.mxu0 %v1359
    %1377 = vmatpush.msra.mxu0 %v1358
    %1378 = vmatpush.msra.mxu0 %v1357
    %1379 = vmatpush.msra.mxu0 %v1356
    %1380 = vmatpush.msra.mxu0 %v1355
    %1381 = vmatpush.msra.mxu0 %v1354
    %1382 = vmatpush.msra.mxu0 %v1353
    %1383 = vmatpush.msra.mxu0 %v1352
    %1384 = vmatmul.f32.gmra.mxu0 %v1366
    %v1385 = vpop.f32.mrf.mxu0
    %v1386 = vadd.f32 %v1362, %v1385
    %1387 = vdwg.mxu0
    %vm1388 = vcmask 254976
    %1389 = vst.msk [vmem:[#allocation10] sm:$0x3] %vm1388, %v1386
    %1391 = vrot.lane.b32.xlu0 %v1386, 96
    %v1392 = vpop.permute.xlu0 %1391
    %1394 = vst.msk [vmem:[#allocation11] sm:$0x3] %vm1388, %v1392
    %v1395 = vmul.f32 %v1386, 0.5
    %v1396 = vmul.f32 %v1395, 1.442695
    %v1397 = vpow.pop %v1396
    %v1398 = vld [vmem:[%s9] sm:$0x3]
    %1400 = vrot.lane.b32.xlu0 %v1397, 96
    %v1401 = vpop.permute.xlu0 %1400
    %v1403 = vmul.f32 %v1398, %v1401
    %v1404 = vadd.f32 %v1403, %v1386
    %1405 = vst.msk [vmem:[#allocation13] sm:$0x3] %vm1388, %v1404
    %s1406 = scalar_lea.vmem %s9, 2
    %v1407 = vld [vmem:[%s1406] sm:$0x3]
    %v1408 = vmul.f32 %v1407, %v1401
    %v1409 = vadd.f32 %v1408, %v1386
    %s1410 = scalar_lea.vmem [#allocation13], 2
    %1411 = vst.msk [vmem:[%s1410] sm:$0x3] %vm1388, %v1409
    // Predicated region
    $region58: #{tpu_custom_call.1} parent=1 // pred_check
      _
    $region59: #{tpu_custom_call.1} parent=1 // pred_check_branch
      %1413 = sbr.rel (0) target = $region61
    $region60: #{tpu_custom_call.1} parent=1 // pred_region
      %1415 = vsyncadd [#allocation4], 0
      %s1417 = sshll.u32 [#allocation10], 4
      %s1418 = int_to_ptr.vmem [resolvable:$true] %s1417
      %s1419 = sshll.u32 %s10, 4
      %s1420 = int_to_ptr.hbm [resolvable:$true] %s1419
      %1422 = dma.vmem_to_hbm [thread:$0]  %s1418, 32, %s1420, [#allocation4]
    $region61: #{tpu_custom_call.1} parent=1 // pred_fallthru
      _
    // Predicated region
    $region62: #{tpu_custom_call.1} parent=1 // pred_check
      _
    $region63: #{tpu_custom_call.1} parent=1 // pred_check_branch
      %1424 = sbr.rel (0) target = $region65
    $region64: #{tpu_custom_call.1} parent=1 // pred_region
      %1426 = vsyncadd [#allocation12], 0
      %s1428 = sshll.u32 [#allocation11], 4
      %s1429 = int_to_ptr.vmem [resolvable:$true] %s1428
      %s1430 = sshll.u32 %s11, 4
      %s1431 = int_to_ptr.hbm [resolvable:$true] %s1430
      %1433 = dma.vmem_to_hbm [thread:$0]  %s1429, 32, %s1431, [#allocation12]
    $region65: #{tpu_custom_call.1} parent=1 // pred_fallthru
      _
    // Predicated region
    $region66: #{tpu_custom_call.1} parent=1 // pred_check
      _
    $region67: #{tpu_custom_call.1} parent=1 // pred_check_branch
      %1435 = sbr.rel (0) target = $region69
    $region68: #{tpu_custom_call.1} parent=1 // pred_region
      %1437 = vsyncadd [#allocation12], 0
      %s1438 = sshll.u32 [#allocation13], 4
      %s1439 = int_to_ptr.vmem [resolvable:$true] %s1438
      %s1440 = sshll.u32 %s12, 4
      %s1441 = int_to_ptr.hbm [resolvable:$true] %s1440
      %1446 = dma.vmem_to_hbm [thread:$0]  %s1439, 64, %s1441, [#allocation12], 32, 32, 2
    $region69: #{tpu_custom_call.1} parent=1 // pred_fallthru
      _
    // Predicated region
    $region70: #{tpu_custom_call.1} parent=1 // pred_check
      _
    $region71: #{tpu_custom_call.1} parent=1 // pred_check_branch
      %1448 = sbr.rel (0) target = $region73
    $region72: #{tpu_custom_call.1} parent=1 // pred_region
      %1450 = vsyncadd [#allocation15], 0
      %s1451 = sshll.u32 [#allocation14], 4
      %s1452 = int_to_ptr.vmem [resolvable:$true] %s1451
      %s1453 = sshll.u32 %s13, 4
      %s1454 = int_to_ptr.hbm [resolvable:$true] %s1453
      %1459 = dma.vmem_to_hbm [thread:$0]  %s1452, 64, %s1454, [#allocation15], 32, 32, 2
    $region73: #{tpu_custom_call.1} parent=1 // pred_fallthru
      _
    // Predicated region
    $region74: #{tpu_custom_call.1} parent=1 // pred_check
      _
    $region75: #{tpu_custom_call.1} parent=1 // pred_check_branch
      %1461 = sbr.rel (0) target = $region77
    $region76: #{tpu_custom_call.1} parent=1 // pred_region
      %1463 = dma.done [#allocation4], 32
    $region77: #{tpu_custom_call.1} parent=1 // pred_fallthru
      _
    // Predicated region
    $region78: #{tpu_custom_call.1} parent=1 // pred_check
      _
    $region79: #{tpu_custom_call.1} parent=1 // pred_check_branch
      %1465 = sbr.rel (0) target = $region81
    $region80: #{tpu_custom_call.1} parent=1 // pred_region
      %1467 = dma.done [#allocation12], 32
    $region81: #{tpu_custom_call.1} parent=1 // pred_fallthru
      _
    // Predicated region
    $region82: #{tpu_custom_call.1} parent=1 // pred_check
      _
    $region83: #{tpu_custom_call.1} parent=1 // pred_check_branch
      %1469 = sbr.rel (0) target = $region85
    $region84: #{tpu_custom_call.1} parent=1 // pred_region
      %1471 = dma.done [#allocation12], 64
    $region85: #{tpu_custom_call.1} parent=1 // pred_fallthru
      _
    // Predicated region
    $region86: #{tpu_custom_call.1} parent=1 // pred_check
      _
    $region87: #{tpu_custom_call.1} parent=1 // pred_check_branch
      %1473 = sbr.rel (0) target = $region89
    $region88: #{tpu_custom_call.1} parent=1 // pred_region
      %1475 = dma.done [#allocation15], 64
    $region89: #{tpu_custom_call.1} parent=1 // pred_fallthru
      _
    %1476 = vsyncpa [#allocation3], 1
    %1477 = vsyncpa [#allocation6], 1
    %1478 = vsyncpa [#allocation9], 1
    %1479 = vsyncpa [#allocation4], 1
    %1480 = vsyncpa [#allocation12], 1
    %1481 = vsyncpa [#allocation15], 1

</llo_original>
